<compile_context>
chip_gen: v6e
topology: v6e:2x2x1
jax: 0.10.0
libtpu: 0.0.40
codegen_flags: <defaults>
</compile_context>

<pallas_src>
import functools

import jax
import jax.numpy as jnp
from jax.experimental import pallas as pl
from jax.experimental.pallas import tpu as pltpu


def _conv_im2col_tile(x_ref, w_ref, th):
    """Recompute the 3x3 conv for row tile pl.program_id(1).

    x_ref: (1, H+2, W+2, Cin) bf16 zero-padded NHWC image (whole image block).
    w_ref: (9*Cin, Cp)        bf16 im2col-ordered weights (Cout padded to Cp).
    Returns (th*W, Cp) f32 conv output for rows [r*th, (r+1)*th).
    """
    _, hp, wp, cin = x_ref.shape
    w_dim = wp - 2
    r = pl.program_id(1)
    row0 = pl.multiple_of(r * th, th)

    cols = []
    for kh in range(3):
        for kw in range(3):
            patch = x_ref[:, pl.ds(row0 + kh, th), pl.ds(kw, w_dim), :]  # (1,th,W,Cin)
            cols.append(patch.reshape(th * w_dim, cin))
    patches = jnp.concatenate(cols, axis=-1)          # (th*W, 9*Cin) bf16

    # single fused MXU contraction, f32 accumulation
    return jnp.dot(patches, w_ref[...], preferred_element_type=jnp.float32)


def conv_stats_kernel(x_ref, w_ref, stats_ref, *, th):
    # stats_ref: (1, 1, 2, Cp) per-(image, row-tile) [sum, sumsq] in f32.
    cp = stats_ref.shape[-1]
    y = _conv_im2col_tile(x_ref, w_ref, th)            # (th*W, Cp) f32
    s1 = jnp.sum(y, axis=0, keepdims=True)             # (1, Cp)
    s2 = jnp.sum(y * y, axis=0, keepdims=True)         # (1, Cp)
    stats_ref[...] = jnp.concatenate([s1, s2], axis=0).reshape(1, 1, 2, cp)


def conv_bn_relu_pool_kernel(x_ref, w_ref, scale_ref, shift_ref, o_ref, *, th):
    # o_ref: (1, th//2, W//2, Cp) pooled output tile (lane-dense, Cp mult of 128).
    _, tho, wo, cp = o_ref.shape
    w_dim = 2 * wo

    y = _conv_im2col_tile(x_ref, w_ref, th)                         # (th*W, Cp) f32
    y = jnp.maximum(y * scale_ref[...] + shift_ref[...], 0.0)       # BN affine + ReLU

    # 2x2 max-pool, all in registers:
    #  - H pool: free leading-dim split (W is a multiple of 8) + VPU max
    #  - W pool: one small sublane regroup + VPU max
    y = y.reshape(th, w_dim, cp)
    hmax = jnp.max(y.reshape(tho, 2, w_dim, cp), axis=1)            # (tho, W, Cp)
    m = jnp.max(hmax.reshape(tho, wo, 2, cp), axis=2)               # (tho, Wo, Cp)
    o_ref[...] = m.reshape(1, tho, wo, cp).astype(o_ref.dtype)      # lane-dense store


def _pick_row_tile(H, W, Cp, budget_bytes=2 << 20):
    """Largest even divisor of H whose f32 conv tile fits the budget while still
    leaving >= 2 row steps per image (pipeline depth / megacore balance)."""
    best = 2
    for t in range(2, H + 1, 2):
        if H % t:
            continue
        if t * W * Cp * 4 <= budget_bytes and H // t >= 2:
            best = t
    return best


def conv_block(x_nchw, weight_oihw, bias, gamma, beta, eps=1e-5):
    """Forward matching ConvBlock(in_c, out_c, 3, 1, 1, 'batch_norm', max_pool=True)."""
    N, Cin, H, W = x_nchw.shape
    Cout = weight_oihw.shape[0]
    assert H % 2 == 0 and W % 2 == 0

    # Pad Cout to a 128-lane multiple: every MXU N dim and every store is
    # lane-dense.  (256-alignment would only pay off if the padded lanes never
    # touched HBM; the pooled output does, so stay at 128.)
    Cp = ((Cout + 127) // 128) * 128
    TH = _pick_row_tile(H, W, Cp)
    R = H // TH
    Ho, Wo = H // 2, W // 2

    # glue: NCHW -> NHWC, spatial zero-pad (conv padding=1), bf16 MXU operand
    x = jnp.transpose(x_nchw, (0, 2, 3, 1))
    x = jnp.pad(x, ((0, 0), (1, 1), (1, 1), (0, 0))).astype(jnp.bfloat16)

    # weights: OIHW -> (kh, kw, cin, cout) -> (9*Cin, Cout), pad cout, bf16
    w_mat = jnp.transpose(weight_oihw, (2, 3, 1, 0)).reshape(9 * Cin, Cout)
    w_mat = jnp.pad(w_mat, ((0, 0), (0, Cp - Cout))).astype(jnp.bfloat16)

    # Conv bias is a per-channel constant in front of training-mode BatchNorm:
    # (y + b) - mean(y + b) == y - mean(y), variance unchanged -> drop it.
    # TODO(synk): only valid while BN follows the conv (the default config).
    del bias

    cparams = pltpu.CompilerParams(
        dimension_semantics=("parallel", "parallel"),   # megacore-friendly grid
        vmem_limit_bytes=48 * 1024 * 1024,              # stays under v7x's 64 MiB
    )

    x_spec = pl.BlockSpec((1, H + 2, W + 2, Cin), lambda n, r: (n, 0, 0, 0))
    w_spec = pl.BlockSpec((9 * Cin, Cp), lambda n, r: (0, 0))

    # ---- pass 1: conv recompute per row tile -> per-tile BN partial stats ----
    stats = pl.pallas_call(
        functools.partial(conv_stats_kernel, th=TH),
        out_shape=jax.ShapeDtypeStruct((N, R, 2, Cp), jnp.float32),
        grid=(N, R),
        in_specs=[x_spec, w_spec],
        out_specs=pl.BlockSpec((1, 1, 2, Cp), lambda n, r: (n, r, 0, 0)),
        compiler_params=cparams,
    )(x, w_mat)

    # ---- tiny JAX combine: batch stats -> folded per-channel BN affine (f32) ----
    # (biased variance, eps=1e-5: matches PyTorch BatchNorm2d training-mode math)
    total = jnp.sum(stats, axis=(0, 1))                 # (2, Cp)
    inv_cnt = 1.0 / float(N * H * W)
    mean = total[0] * inv_cnt
    var = total[1] * inv_cnt - mean * mean
    inv_std = jax.lax.rsqrt(var + eps)
    g_p = jnp.pad(gamma, (0, Cp - Cout))
    be_p = jnp.pad(beta, (0, Cp - Cout))
    scale = (g_p * inv_std).reshape(1, Cp).astype(jnp.float32)
    shift = (be_p - mean * g_p * inv_std).reshape(1, Cp).astype(jnp.float32)

    # ---- pass 2: conv recompute + BN affine + ReLU + 2x2 max-pool (fused) ----
    pooled = pl.pallas_call(
        functools.partial(conv_bn_relu_pool_kernel, th=TH),
        out_shape=jax.ShapeDtypeStruct((N, Ho, Wo, Cp), x_nchw.dtype),
        grid=(N, R),
        in_specs=[
            x_spec,
            w_spec,
            pl.BlockSpec((1, Cp), lambda n, r: (0, 0)),
            pl.BlockSpec((1, Cp), lambda n, r: (0, 0)),
        ],
        out_specs=pl.BlockSpec((1, TH // 2, Wo, Cp), lambda n, r: (n, r, 0, 0)),
        compiler_params=cparams,
    )(x, w_mat, scale, shift)

    # drop channel padding, back to NCHW (boundary glue; see layout TODO above)
    return jnp.transpose(pooled[..., :Cout], (0, 3, 1, 2))


def conv_block_reference(x_nchw, weight_oihw, bias, gamma, beta):
    """Plain-JAX f32 reference of the PyTorch forward (for validation)."""
    y = jax.lax.conv_general_dilated(
        x_nchw, weight_oihw, window_strides=(1, 1), padding=((1, 1), (1, 1)),
        dimension_numbers=("NCHW", "OIHW", "NCHW"))
    y = y + bias[None, :, None, None]
    mean = jnp.mean(y, axis=(0, 2, 3), keepdims=True)
    var = jnp.mean((y - mean) ** 2, axis=(0, 2, 3), keepdims=True)
    y = (y - mean) / jnp.sqrt(var + 1e-5)
    y = y * gamma[None, :, None, None] + beta[None, :, None, None]
    y = jnp.maximum(y, 0.0)
    N, C, H, W = y.shape
    y = y.reshape(N, C, H // 2, 2, W // 2, 2)
    return jnp.max(y, axis=(3, 5))


if __name__ == "__main__":
    # deterministic synthetic params / input (no checkpoint load)
    # TODO(synk): only the default config (norm_type='batch_norm', max_pool=True)
    #             is implemented; 'layer_norm' / no-norm variants are omitted.
    key = jax.random.PRNGKey(0)
    k_x, k_w, k_b, k_g, k_be = jax.random.split(key, 5)

    N, Cin, H, W, Cout = 2, 4, 16, 16, 8
    x = jax.random.normal(k_x, (N, Cin, H, W), dtype=jnp.float32)
    weight = 0.1 * jax.random.normal(k_w, (Cout, Cin, 3, 3), dtype=jnp.float32)
    bias = 0.1 * jax.random.normal(k_b, (Cout,), dtype=jnp.float32)
    gamma = 1.0 + 0.1 * jax.random.normal(k_g, (Cout,), dtype=jnp.float32)
    beta = 0.1 * jax.random.normal(k_be, (Cout,), dtype=jnp.float32)

    out = jax.block_until_ready(conv_block(x, weight, bias, gamma, beta))
    ref = jax.block_until_ready(conv_block_reference(x, weight, bias, gamma, beta))

    assert out.shape == (N, Cout, H // 2, W // 2), out.shape
    # tolerance reflects bf16 MXU operands (f32 accumulation); reference is f32
    assert jnp.allclose(out, ref, rtol=2e-2, atol=2e-2), float(jnp.max(jnp.abs(out - ref)))

    print("KERNEL_OK")
</pallas_src>

<mosaic_0001>
module attributes {stable_mosaic.version = 11 : i64} {
  func.func @conv_stats_kernel(%arg0: i32, %arg1: i32, %arg2: memref<1x18x18x4xbf16, #tpu.memory_space<vmem>>, %arg3: memref<36x128xbf16, #tpu.memory_space<vmem>>, %arg4: memref<1x1x2x128xf32, #tpu.memory_space<vmem>>) attributes {dimension_semantics = [#tpu.dimension_semantics<parallel>, #tpu.dimension_semantics<parallel>], iteration_bounds = array<i64: 2, 2>, scalar_prefetch = 0 : i64, scratch_operands = 0 : i64, tpu.core_type = #tpu.core_type<tc>, window_params = [{transform_indices = @transform_0, window_bounds = array<i64: 1, 18, 18, 4>}, {pipeline_mode = #tpu.pipeline_mode<synchronous>, transform_indices = @transform_1, window_bounds = array<i64: 36, 128>}, {transform_indices = @transform_2, window_bounds = array<i64: 1, 1, 2, 128>}]} {
    %c8_i32 = arith.constant 8 : i32
    %0 = arith.muli %arg1, %c8_i32 : i32
    %1 = tpu.assume_multiple %0, 8 : i32
    %c0_i32 = arith.constant 0 : i32
    %2 = arith.addi %1, %c0_i32 : i32
    %c0 = arith.constant 0 : index
    %3 = arith.index_cast %2 : i32 to index
    %c0_0 = arith.constant 0 : index
    %c0_1 = arith.constant 0 : index
    %4 = vector.load %arg2[%c0, %3, %c0_0, %c0_1] : memref<1x18x18x4xbf16, #tpu.memory_space<vmem>>, vector<1x8x16x4xbf16>
    %5 = vector.shape_cast %4 : vector<1x8x16x4xbf16> to vector<128x4xbf16>
    %c0_i32_2 = arith.constant 0 : i32
    %6 = arith.addi %1, %c0_i32_2 : i32
    %c0_3 = arith.constant 0 : index
    %7 = arith.index_cast %6 : i32 to index
    %c1 = arith.constant 1 : index
    %c0_4 = arith.constant 0 : index
    %8 = vector.load %arg2[%c0_3, %7, %c1, %c0_4] : memref<1x18x18x4xbf16, #tpu.memory_space<vmem>>, vector<1x8x16x4xbf16>
    %9 = vector.shape_cast %8 : vector<1x8x16x4xbf16> to vector<128x4xbf16>
    %c0_i32_5 = arith.constant 0 : i32
    %10 = arith.addi %1, %c0_i32_5 : i32
    %c0_6 = arith.constant 0 : index
    %11 = arith.index_cast %10 : i32 to index
    %c2 = arith.constant 2 : index
    %c0_7 = arith.constant 0 : index
    %12 = vector.load %arg2[%c0_6, %11, %c2, %c0_7] : memref<1x18x18x4xbf16, #tpu.memory_space<vmem>>, vector<1x8x16x4xbf16>
    %13 = vector.shape_cast %12 : vector<1x8x16x4xbf16> to vector<128x4xbf16>
    %c1_i32 = arith.constant 1 : i32
    %14 = arith.addi %1, %c1_i32 : i32
    %c0_8 = arith.constant 0 : index
    %15 = arith.index_cast %14 : i32 to index
    %c0_9 = arith.constant 0 : index
    %c0_10 = arith.constant 0 : index
    %16 = vector.load %arg2[%c0_8, %15, %c0_9, %c0_10] : memref<1x18x18x4xbf16, #tpu.memory_space<vmem>>, vector<1x8x16x4xbf16>
    %17 = vector.shape_cast %16 : vector<1x8x16x4xbf16> to vector<128x4xbf16>
    %c1_i32_11 = arith.constant 1 : i32
    %18 = arith.addi %1, %c1_i32_11 : i32
    %c0_12 = arith.constant 0 : index
    %19 = arith.index_cast %18 : i32 to index
    %c1_13 = arith.constant 1 : index
    %c0_14 = arith.constant 0 : index
    %20 = vector.load %arg2[%c0_12, %19, %c1_13, %c0_14] : memref<1x18x18x4xbf16, #tpu.memory_space<vmem>>, vector<1x8x16x4xbf16>
    %21 = vector.shape_cast %20 : vector<1x8x16x4xbf16> to vector<128x4xbf16>
    %c1_i32_15 = arith.constant 1 : i32
    %22 = arith.addi %1, %c1_i32_15 : i32
    %c0_16 = arith.constant 0 : index
    %23 = arith.index_cast %22 : i32 to index
    %c2_17 = arith.constant 2 : index
    %c0_18 = arith.constant 0 : index
    %24 = vector.load %arg2[%c0_16, %23, %c2_17, %c0_18] : memref<1x18x18x4xbf16, #tpu.memory_space<vmem>>, vector<1x8x16x4xbf16>
    %25 = vector.shape_cast %24 : vector<1x8x16x4xbf16> to vector<128x4xbf16>
    %c2_i32 = arith.constant 2 : i32
    %26 = arith.addi %1, %c2_i32 : i32
    %c0_19 = arith.constant 0 : index
    %27 = arith.index_cast %26 : i32 to index
    %c0_20 = arith.constant 0 : index
    %c0_21 = arith.constant 0 : index
    %28 = vector.load %arg2[%c0_19, %27, %c0_20, %c0_21] : memref<1x18x18x4xbf16, #tpu.memory_space<vmem>>, vector<1x8x16x4xbf16>
    %29 = vector.shape_cast %28 : vector<1x8x16x4xbf16> to vector<128x4xbf16>
    %c2_i32_22 = arith.constant 2 : i32
    %30 = arith.addi %1, %c2_i32_22 : i32
    %c0_23 = arith.constant 0 : index
    %31 = arith.index_cast %30 : i32 to index
    %c1_24 = arith.constant 1 : index
    %c0_25 = arith.constant 0 : index
    %32 = vector.load %arg2[%c0_23, %31, %c1_24, %c0_25] : memref<1x18x18x4xbf16, #tpu.memory_space<vmem>>, vector<1x8x16x4xbf16>
    %33 = vector.shape_cast %32 : vector<1x8x16x4xbf16> to vector<128x4xbf16>
    %c2_i32_26 = arith.constant 2 : i32
    %34 = arith.addi %1, %c2_i32_26 : i32
    %c0_27 = arith.constant 0 : index
    %35 = arith.index_cast %34 : i32 to index
    %c2_28 = arith.constant 2 : index
    %c0_29 = arith.constant 0 : index
    %36 = vector.load %arg2[%c0_27, %35, %c2_28, %c0_29] : memref<1x18x18x4xbf16, #tpu.memory_space<vmem>>, vector<1x8x16x4xbf16>
    %37 = vector.shape_cast %36 : vector<1x8x16x4xbf16> to vector<128x4xbf16>
    %38 = tpu.concatenate %5, %9, %13, %17, %21, %25, %29, %33, %37 in 1 : vector<128x4xbf16>, vector<128x4xbf16>, vector<128x4xbf16>, vector<128x4xbf16>, vector<128x4xbf16>, vector<128x4xbf16>, vector<128x4xbf16>, vector<128x4xbf16>, vector<128x4xbf16> -> vector<128x36xbf16>
    %c0_30 = arith.constant 0 : index
    %c0_31 = arith.constant 0 : index
    %39 = vector.load %arg3[%c0_30, %c0_31] : memref<36x128xbf16, #tpu.memory_space<vmem>>, vector<36x128xbf16>
    %cst = arith.constant dense<0.000000e+00> : vector<128x128xf32>
    %40 = tpu.matmul %38, %39, %cst {dimension_numbers = #tpu.dot_dimension_numbers<[1], [0], [0], [1], [0, 0, 1, 1], [], []>} : vector<128x36xbf16>, vector<36x128xbf16>, vector<128x128xf32> -> vector<128x128xf32>
    %cst_32 = arith.constant dense<0.000000e+00> : vector<128xf32>
    %41 = vector.multi_reduction <add>, %40, %cst_32 [0] : vector<128x128xf32> to vector<128xf32>
    %42 = vector.shape_cast %41 : vector<128xf32> to vector<1x128xf32>
    %43 = arith.mulf %40, %40 : vector<128x128xf32>
    %cst_33 = arith.constant dense<0.000000e+00> : vector<128xf32>
    %44 = vector.multi_reduction <add>, %43, %cst_33 [0] : vector<128x128xf32> to vector<128xf32>
    %45 = vector.shape_cast %44 : vector<128xf32> to vector<1x128xf32>
    %46 = tpu.concatenate %42, %45 in 0 : vector<1x128xf32>, vector<1x128xf32> -> vector<2x128xf32>
    %47 = vector.shape_cast %46 : vector<2x128xf32> to vector<1x1x2x128xf32>
    %c0_34 = arith.constant 0 : index
    %c0_35 = arith.constant 0 : index
    %c0_36 = arith.constant 0 : index
    %c0_37 = arith.constant 0 : index
    %48 = vector.load %arg4[%c0_34, %c0_35, %c0_36, %c0_37] : memref<1x1x2x128xf32, #tpu.memory_space<vmem>>, vector<1x1x2x128xf32>
    tpu.vector_store %arg4[%c0_34, %c0_35, %c0_36, %c0_37], %47 {strides = array<i32>} : memref<1x1x2x128xf32, #tpu.memory_space<vmem>>, vector<1x1x2x128xf32>,
    return
  }
  func.func @transform_0(%arg0: i32, %arg1: i32) -> (i32, i32, i32, i32) {
    %c0_i32 = arith.constant 0 : i32
    %c0_i32_0 = arith.constant 0 : i32
    %c0_i32_1 = arith.constant 0 : i32
    %c0_i32_2 = arith.constant 0 : i32
    return %arg0, %c0_i32, %c0_i32_0, %c0_i32_1 : i32, i32, i32, i32
  }
  func.func @transform_1(%arg0: i32, %arg1: i32) -> (i32, i32) {
    %c0_i32 = arith.constant 0 : i32
    %c0_i32_0 = arith.constant 0 : i32
    %c0_i32_1 = arith.constant 0 : i32
    return %c0_i32, %c0_i32_0 : i32, i32
  }
  func.func @transform_2(%arg0: i32, %arg1: i32) -> (i32, i32, i32, i32) {
    %c0_i32 = arith.constant 0 : i32
    %c0_i32_0 = arith.constant 0 : i32
    %c0_i32_1 = arith.constant 0 : i32
    return %arg0, %arg1, %c0_i32, %c0_i32_0 : i32, i32, i32, i32
  }
}

</mosaic_0001>

<llo_original>
// kernel: tpu_custom_call.1
$region0: #{tpu_custom_call.1}
  #allocation0 [shape = 'u32[]', space=smem, size = 0x4, offset = 0x4, fixed_abs, tag = 'smem constant byte address 0x4 - core index']
  #allocation1 [shape = 'u32[144,128]{1,0:T(1,128)}', space=vmem, size = 0x12000, scoped, tag = 'internal scratch']
  %s0 = inlined_call_operand.vmem [shape: bf16[2,18,18,4], index: 0, kind: input, shape index: {}]
  %s1 = inlined_call_operand.vmem [shape: bf16[36,128], index: 1, kind: input, shape index: {}]
  %s2 = inlined_call_operand.hbm [shape: f32[2,2,2,128], index: 2, kind: output, shape index: {}]
  %s3 = sld [smem:[#allocation0]]
  $region41: #{tpu_custom_call.1} parent=0
    _
  %s5 = ssub.s32 1, %s3
  %s6 = scalar_select 0, %s5, %s3
  $region1: #{tpu_custom_call.1} parent=0
    #allocation2 [shape = 'u8[2048]{0}', space=vmem, size = 0x800, scoped, tag = 'output window, operand 0']
    #allocation3 [shape = 's32[2]{0}', space=sflag, size = 0x8, scoped, tag = 'scoped memory for tpu_custom_call.1']
    %7 = vsyncpa [#allocation3], 0
    %s8 = scalar_lea.sflag [#allocation3], 1
    %9 = vsyncpa %s8, 0
    loop: start=0, step=1, limit=6
    $region2: #{tpu_custom_call.1} parent=1 // loop_pre_header
      _
    $region3: #{tpu_custom_call.1} parent=1 // loop_header
      %s11 = sphi 0, %s15
      %p12 = scmp.ge.s32.totalorder %s11, 6
      %s18 = sphi 0, %s30
      %s19 = sphi 0, %s26
      %s20 = sphi 0, %s18
      %s21 = sphi 0, %s19
      %s22 = sphi 0, %s20
      %s23 = sphi 0, %s21
      %s33 = sphi 0, %s35
      %s36 = sphi 0, %s33
      %s37 = sphi 0, %s36
      %s53 = sphi 0, %s37
      %s57 = sphi 0, %s57
      %s59 = sphi 0, %s57
      %s60 = sphi 0, %s59
      %s74 = sphi 0, %s60
      %s82 = sphi 0, %s84
      %s85 = sphi 0, %s82
      %s86 = sphi 0, %s85
      %s102 = sphi 0, %s86
    $region4: #{tpu_custom_call.1} parent=1 // loop_header_branch
      %14 = sbr.rel (%p12) target = $region8
    $region5: #{tpu_custom_call.1} parent=1 // loop_body
      %s16 = ssub.s32 %s11, 1
      %s17 = ssub.s32 %s11, 2
      %s24 = sadd.s32 1, %s19
      %p25 = scmp.ge.s32.totalorder %s24, 2
      %s26 = scalar_select %p25, 0, %s24
      %s27 = sadd.s32 1, %s18
      %s28 = scalar_select %p25, %s27, %s18
      %p29 = scmp.ge.s32.totalorder %s28, 2
      %s30 = scalar_select %p29, 0, %s28
      %s31 = ssub.s32 %s18, %s30
      %p32 = scmp.eq.s32.totalorder %s31, 0
      %s34 = sadd.s32 %s33, 1
      %s35 = scalar_select %p32, %s33, %s34
      %p38 = pneg %p32
      %p39 = scmp.eq.s32.totalorder %s11, 3
      %p40 = por %p38, %p39
      %p41 = scmp.ne.s32.totalorder %s33, %s36
      %p42 = scmp.eq.s32.totalorder %s11, 0
      %p43 = por %p41, %p42
      %p44 = scmp.ne.s32.totalorder %s33, %s36
      %p45 = scmp.eq.s32.totalorder %s16, 3
      %p46 = por %p44, %p45
      %p47 = scmp.ne.s32.totalorder %s36, %s37
      %p48 = scmp.eq.s32.totalorder %s16, 0
      %p49 = por %p47, %p48
      %p50 = scmp.ne.s32.totalorder %s36, %s37
      %p51 = scmp.eq.s32.totalorder %s17, 3
      %p52 = por %p50, %p51
      %p54 = scmp.ne.s32.totalorder %s37, %s53
      %p55 = scmp.eq.s32.totalorder %s17, 0
      %p56 = por %p54, %p55
      %s58 = sadd.s32 %s57, 1
      %p61 = scmp.eq.s32.totalorder %s11, 3
      %p62 = scmp.ne.s32.totalorder %s57, %s59
      %p63 = scmp.eq.s32.totalorder %s11, 0
      %p64 = por %p62, %p63
      %p65 = scmp.ne.s32.totalorder %s57, %s59
      %p66 = scmp.eq.s32.totalorder %s16, 3
      %p67 = por %p65, %p66
      %p68 = scmp.ne.s32.totalorder %s59, %s60
      %p69 = scmp.eq.s32.totalorder %s16, 0
      %p70 = por %p68, %p69
      %p71 = scmp.ne.s32.totalorder %s59, %s60
      %p72 = scmp.eq.s32.totalorder %s17, 3
      %p73 = por %p71, %p72
      %p75 = scmp.ne.s32.totalorder %s60, %s74
      %p76 = scmp.eq.s32.totalorder %s17, 0
      %p77 = por %p75, %p76
      %s78 = ssub.s32 %s18, %s30
      %s79 = ssub.s32 %s19, %s26
      %s80 = sor.u32 %s78, %s79
      %p81 = scmp.eq.s32.totalorder %s80, 0
      %s83 = sadd.s32 %s82, 1
      %s84 = scalar_select %p81, %s82, %s83
      %p87 = pneg %p81
      %p88 = scmp.eq.s32.totalorder %s11, 3
      %p89 = por %p87, %p88
      %p90 = scmp.ne.s32.totalorder %s82, %s85
      %p91 = scmp.eq.s32.totalorder %s11, 0
      %p92 = por %p90, %p91
      %p93 = scmp.ne.s32.totalorder %s82, %s85
      %p94 = scmp.eq.s32.totalorder %s16, 3
      %p95 = por %p93, %p94
      %p96 = scmp.ne.s32.totalorder %s85, %s86
      %p97 = scmp.eq.s32.totalorder %s16, 0
      %p98 = por %p96, %p97
      %p99 = scmp.ne.s32.totalorder %s85, %s86
      %p100 = scmp.eq.s32.totalorder %s17, 3
      %p101 = por %p99, %p100
      %p103 = scmp.ne.s32.totalorder %s86, %s102
      %p104 = scmp.eq.s32.totalorder %s17, 0
      %p105 = por %p103, %p104
      %p106 = scmp.le.s32.totalorder 1, %s11
      %p107 = scmp.lt.s32.totalorder %s11, 5
      %p108 = pnand %p106, %p107
      %p109 = pneg %p108
      // Predicated region
      $region9: #{tpu_custom_call.1} parent=5 // pred_check
        _
      $region10: #{tpu_custom_call.1} parent=5 // pred_check_branch
        %111 = sbr.rel (%p108) target = $region12
      $region11: #{tpu_custom_call.1} parent=5 // pred_region
        %s112 = ssub.s32 %s11, 1
        // Predicated region
        $region13: #{tpu_custom_call.1} parent=11 // pred_check
          %p113 = pneg %p70
        $region14: #{tpu_custom_call.1} parent=11 // pred_check_branch
          %115 = sbr.rel (%p113) target = $region16
        $region15: #{tpu_custom_call.1} parent=11 // pred_region
          _
        $region16: #{tpu_custom_call.1} parent=11 // pred_fallthru
          _
      $region12: #{tpu_custom_call.1} parent=5 // pred_fallthru
        _
      %p116 = scmp.lt.s32.totalorder %s11, 4
      // Predicated region
      $region17: #{tpu_custom_call.1} parent=5 // pred_check
        %p117 = pneg %p116
      $region18: #{tpu_custom_call.1} parent=5 // pred_check_branch
        %119 = sbr.rel (%p117) target = $region20
      $region19: #{tpu_custom_call.1} parent=5 // pred_region
        // Predicated region
        $region21: #{tpu_custom_call.1} parent=19 // pred_check
          %p120 = pneg %p43
        $region22: #{tpu_custom_call.1} parent=19 // pred_check_branch
          %122 = sbr.rel (%p120) target = $region24
        $region23: #{tpu_custom_call.1} parent=19 // pred_region
          %p123 = scmp.lt.s32.totalorder %s18, 1
          %s124 = scalar_select %p123, %s18, 1
          %s125 = smul.addr %s124, 54
          %s126 = smul.addr %s125, 4
          %s127 = scalar_lea.vmem %s0, %s126
        $region24: #{tpu_custom_call.1} parent=19 // pred_fallthru
          _
      $region20: #{tpu_custom_call.1} parent=5 // pred_fallthru
        _
      %p128 = scmp.le.s32.totalorder 1, %s11
      %p129 = scmp.lt.s32.totalorder %s11, 5
      %p130 = pnand %p128, %p129
      %p131 = pneg %p130
      // Predicated region
      $region25: #{tpu_custom_call.1} parent=5 // pred_check
        _
      $region26: #{tpu_custom_call.1} parent=5 // pred_check_branch
        %133 = sbr.rel (%p130) target = $region28
      $region27: #{tpu_custom_call.1} parent=5 // pred_region
        %s134 = ssub.s32 %s11, 1
        %p135 = scmp.lt.s32.totalorder %s20, 1
        %s136 = scalar_select %p135, %s20, 1
        %s137 = smul.addr %s136, 54
        %s138 = smul.addr %s137, 4
        %s139 = scalar_lea.vmem %s0, %s138
        %p140 = pneg %p49
        %p141 = pneg %p46
        %p142 = pneg %p70
        %p143 = pneg %p67
        %p144 = pneg %p98
        %p145 = pneg %p95
        %s146 = sand.u32 %s85, 1
        %s147 = scalar_lea.sflag [#allocation3], %s146
        %s148 = sand.u32 %s85, 1
        %s149 = smul.addr %s148, 2
        %s150 = scalar_lea.vmem [#allocation2], %s149
        %p151 = scmp.lt.s32.totalorder %s20, 1
        %s152 = scalar_select %p151, %s20, 1
        %s153 = smul.addr %s152, 54
        %s154 = smul.addr %s153, 4
        %s155 = scalar_lea.vmem %s0, %s154
        %s157 = smul.u32 %s21, 8
        %s158 = smul.u32 %s157, 3
        %s159 = smul.addr %s158, 4
        %s160 = scalar_lea.vmem %s155, %s159
        %v161 = vld [vmem:[%s160] sm:$0xf]
        %v162 = vld [vmem:[%s160 + $0x4] sm:$0xf]
        %v163 = vld [vmem:[%s160 + $0xc] sm:$0xf]
        %v164 = vld [vmem:[%s160 + $0x10] sm:$0xf]
        %v165 = vld [vmem:[%s160 + $0x18] sm:$0xf]
        %v166 = vld [vmem:[%s160 + $0x1c] sm:$0xf]
        %v167 = vld [vmem:[%s160 + $0x24] sm:$0xf]
        %v168 = vld [vmem:[%s160 + $0x28] sm:$0xf]
        %v169 = vld [vmem:[%s160 + $0x30] sm:$0xf]
        %v170 = vld [vmem:[%s160 + $0x34] sm:$0xf]
        %v171 = vld [vmem:[%s160 + $0x3c] sm:$0xf]
        %v172 = vld [vmem:[%s160 + $0x40] sm:$0xf]
        %v173 = vld [vmem:[%s160 + $0x48] sm:$0xf]
        %v174 = vld [vmem:[%s160 + $0x4c] sm:$0xf]
        %v175 = vld [vmem:[%s160 + $0x54] sm:$0xf]
        %v176 = vld [vmem:[%s160 + $0x58] sm:$0xf]
        %v177 = vld [vmem:[%s160 + $0x8] sm:$0x1]
        %v178 = vld [vmem:[%s160 + $0x14] sm:$0x1]
        %v179 = vld [vmem:[%s160 + $0x20] sm:$0x1]
        %v180 = vld [vmem:[%s160 + $0x2c] sm:$0x1]
        %v181 = vld [vmem:[%s160 + $0x38] sm:$0x1]
        %v182 = vld [vmem:[%s160 + $0x44] sm:$0x1]
        %v183 = vld [vmem:[%s160 + $0x50] sm:$0x1]
        %v184 = vld [vmem:[%s160 + $0x5c] sm:$0x1]
        %vm185 = vsmask.f32 3328
        %vm186 = vsmask.f32 7440
        %vm187 = vmor %vm185, %vm186
        %v189 = vshrl.u32 %v161, 16
        %v191 = vrot.slane %v189, 4
        %v192 = vshll.u32 %v161, 16
        %v194 = vrot.slane %v192, 5
        %v195 = vor.u32 %v191, %v194
        %v196 = vrot.slane %v195, 4
        %v198 = vshll.u32 %v162, 16
        %v200 = vrot.slane %v198, 5
        %v201 = vsel %vm187, %v196, %v200
        %v202 = vshrl.u32 %v162, 16
        %v204 = vrot.slane %v202, 4
        %v205 = vor.u32 %v204, %v200
        %v206 = vrot.slane %v205, 4
        %v208 = vshll.u32 %v177, 16
        %v210 = vrot.slane %v208, 5
        %v211 = vsel %vm187, %v206, %v210
        %v213 = vshrl.u32 %v163, 16
        %v215 = vrot.slane %v213, 4
        %v216 = vshll.u32 %v163, 16
        %v218 = vrot.slane %v216, 5
        %v219 = vor.u32 %v215, %v218
        %v220 = vrot.slane %v219, 4
        %v222 = vshll.u32 %v164, 16
        %v224 = vrot.slane %v222, 5
        %v225 = vsel %vm187, %v220, %v224
        %v226 = vshrl.u32 %v164, 16
        %v228 = vrot.slane %v226, 4
        %v229 = vor.u32 %v228, %v224
        %v230 = vrot.slane %v229, 4
        %v232 = vshll.u32 %v178, 16
        %v234 = vrot.slane %v232, 5
        %v235 = vsel %vm187, %v230, %v234
        %v237 = vshrl.u32 %v165, 16
        %v239 = vrot.slane %v237, 4
        %v240 = vshll.u32 %v165, 16
        %v242 = vrot.slane %v240, 5
        %v243 = vor.u32 %v239, %v242
        %v244 = vrot.slane %v243, 4
        %v246 = vshll.u32 %v166, 16
        %v248 = vrot.slane %v246, 5
        %v249 = vsel %vm187, %v244, %v248
        %v250 = vshrl.u32 %v166, 16
        %v252 = vrot.slane %v250, 4
        %v253 = vor.u32 %v252, %v248
        %v254 = vrot.slane %v253, 4
        %v256 = vshll.u32 %v179, 16
        %v258 = vrot.slane %v256, 5
        %v259 = vsel %vm187, %v254, %v258
        %v261 = vshrl.u32 %v167, 16
        %v263 = vrot.slane %v261, 4
        %v264 = vshll.u32 %v167, 16
        %v266 = vrot.slane %v264, 5
        %v267 = vor.u32 %v263, %v266
        %v268 = vrot.slane %v267, 4
        %v270 = vshll.u32 %v168, 16
        %v272 = vrot.slane %v270, 5
        %v273 = vsel %vm187, %v268, %v272
        %v274 = vshrl.u32 %v168, 16
        %v276 = vrot.slane %v274, 4
        %v277 = vor.u32 %v276, %v272
        %v278 = vrot.slane %v277, 4
        %v280 = vshll.u32 %v180, 16
        %v282 = vrot.slane %v280, 5
        %v283 = vsel %vm187, %v278, %v282
        %v285 = vshrl.u32 %v169, 16
        %v287 = vrot.slane %v285, 4
        %v288 = vshll.u32 %v169, 16
        %v290 = vrot.slane %v288, 5
        %v291 = vor.u32 %v287, %v290
        %v292 = vrot.slane %v291, 4
        %v294 = vshll.u32 %v170, 16
        %v296 = vrot.slane %v294, 5
        %v297 = vsel %vm187, %v292, %v296
        %v298 = vshrl.u32 %v170, 16
        %v300 = vrot.slane %v298, 4
        %v301 = vor.u32 %v300, %v296
        %v302 = vrot.slane %v301, 4
        %v304 = vshll.u32 %v181, 16
        %v306 = vrot.slane %v304, 5
        %v307 = vsel %vm187, %v302, %v306
        %v309 = vshrl.u32 %v171, 16
        %v311 = vrot.slane %v309, 4
        %v312 = vshll.u32 %v171, 16
        %v314 = vrot.slane %v312, 5
        %v315 = vor.u32 %v311, %v314
        %v316 = vrot.slane %v315, 4
        %v318 = vshll.u32 %v172, 16
        %v320 = vrot.slane %v318, 5
        %v321 = vsel %vm187, %v316, %v320
        %v322 = vshrl.u32 %v172, 16
        %v324 = vrot.slane %v322, 4
        %v325 = vor.u32 %v324, %v320
        %v326 = vrot.slane %v325, 4
        %v328 = vshll.u32 %v182, 16
        %v330 = vrot.slane %v328, 5
        %v331 = vsel %vm187, %v326, %v330
        %v333 = vshrl.u32 %v173, 16
        %v335 = vrot.slane %v333, 4
        %v336 = vshll.u32 %v173, 16
        %v338 = vrot.slane %v336, 5
        %v339 = vor.u32 %v335, %v338
        %v340 = vrot.slane %v339, 4
        %v342 = vshll.u32 %v174, 16
        %v344 = vrot.slane %v342, 5
        %v345 = vsel %vm187, %v340, %v344
        %v346 = vshrl.u32 %v174, 16
        %v348 = vrot.slane %v346, 4
        %v349 = vor.u32 %v348, %v344
        %v350 = vrot.slane %v349, 4
        %v352 = vshll.u32 %v183, 16
        %v354 = vrot.slane %v352, 5
        %v355 = vsel %vm187, %v350, %v354
        %v357 = vshrl.u32 %v175, 16
        %v359 = vrot.slane %v357, 4
        %v360 = vshll.u32 %v175, 16
        %v362 = vrot.slane %v360, 5
        %v363 = vor.u32 %v359, %v362
        %v364 = vrot.slane %v363, 4
        %v366 = vshll.u32 %v176, 16
        %v368 = vrot.slane %v366, 5
        %v369 = vsel %vm187, %v364, %v368
        %v370 = vshrl.u32 %v176, 16
        %v372 = vrot.slane %v370, 4
        %v373 = vor.u32 %v372, %v368
        %v374 = vrot.slane %v373, 4
        %v376 = vshll.u32 %v184, 16
        %v378 = vrot.slane %v376, 5
        %v379 = vsel %vm187, %v374, %v378
        %v380 = vld [vmem:[%s160] sm:$0xe]
        %v381 = vld [vmem:[%s160 + $0xc] sm:$0xe]
        %v382 = vld [vmem:[%s160 + $0x18] sm:$0xe]
        %v383 = vld [vmem:[%s160 + $0x24] sm:$0xe]
        %v384 = vld [vmem:[%s160 + $0x30] sm:$0xe]
        %v385 = vld [vmem:[%s160 + $0x3c] sm:$0xe]
        %v386 = vld [vmem:[%s160 + $0x48] sm:$0xe]
        %v387 = vld [vmem:[%s160 + $0x54] sm:$0xe]
        %vm412 = vcmask 1042432
        %vm413 = vcmask 1046532
        %vm414 = vmor %vm412, %vm413
        %v415 = vrot.slane %v380, 5
        %v416 = vrot.slane %v415, 4
        %v417 = vrot.slane %v162, 5
        %v418 = vsel %vm414, %v416, %v417
        %v419 = vrot.slane %v417, 4
        %v420 = vrot.slane %v177, 5
        %v421 = vsel %vm414, %v419, %v420
        %v422 = vrot.slane %v381, 5
        %v423 = vrot.slane %v422, 4
        %v424 = vrot.slane %v164, 5
        %v425 = vsel %vm414, %v423, %v424
        %v426 = vrot.slane %v424, 4
        %v427 = vrot.slane %v178, 5
        %v428 = vsel %vm414, %v426, %v427
        %v429 = vrot.slane %v382, 5
        %v430 = vrot.slane %v429, 4
        %v431 = vrot.slane %v166, 5
        %v432 = vsel %vm414, %v430, %v431
        %v433 = vrot.slane %v431, 4
        %v434 = vrot.slane %v179, 5
        %v435 = vsel %vm414, %v433, %v434
        %v436 = vrot.slane %v383, 5
        %v437 = vrot.slane %v436, 4
        %v438 = vrot.slane %v168, 5
        %v439 = vsel %vm414, %v437, %v438
        %v440 = vrot.slane %v438, 4
        %v441 = vrot.slane %v180, 5
        %v442 = vsel %vm414, %v440, %v441
        %v443 = vrot.slane %v384, 5
        %v444 = vrot.slane %v443, 4
        %v445 = vrot.slane %v170, 5
        %v446 = vsel %vm414, %v444, %v445
        %v447 = vrot.slane %v445, 4
        %v448 = vrot.slane %v181, 5
        %v449 = vsel %vm414, %v447, %v448
        %v450 = vrot.slane %v385, 5
        %v451 = vrot.slane %v450, 4
        %v452 = vrot.slane %v172, 5
        %v453 = vsel %vm414, %v451, %v452
        %v454 = vrot.slane %v452, 4
        %v455 = vrot.slane %v182, 5
        %v456 = vsel %vm414, %v454, %v455
        %v457 = vrot.slane %v386, 5
        %v458 = vrot.slane %v457, 4
        %v459 = vrot.slane %v174, 5
        %v460 = vsel %vm414, %v458, %v459
        %v461 = vrot.slane %v459, 4
        %v462 = vrot.slane %v183, 5
        %v463 = vsel %vm414, %v461, %v462
        %v464 = vrot.slane %v387, 5
        %v465 = vrot.slane %v464, 4
        %v466 = vrot.slane %v176, 5
        %v467 = vsel %vm414, %v465, %v466
        %v468 = vrot.slane %v466, 4
        %v469 = vrot.slane %v184, 5
        %v470 = vsel %vm414, %v468, %v469
        %s471 = sadd.s32 %s157, 1
        %s472 = smul.u32 %s471, 3
        %s473 = smul.addr %s472, 4
        %s474 = scalar_lea.vmem %s155, %s473
        %v475 = vld [vmem:[%s474] sm:$0xf]
        %v476 = vld [vmem:[%s474 + $0x4] sm:$0xf]
        %v477 = vld [vmem:[%s474 + $0xc] sm:$0xf]
        %v478 = vld [vmem:[%s474 + $0x10] sm:$0xf]
        %v479 = vld [vmem:[%s474 + $0x18] sm:$0xf]
        %v480 = vld [vmem:[%s474 + $0x1c] sm:$0xf]
        %v481 = vld [vmem:[%s474 + $0x24] sm:$0xf]
        %v482 = vld [vmem:[%s474 + $0x28] sm:$0xf]
        %v483 = vld [vmem:[%s474 + $0x30] sm:$0xf]
        %v484 = vld [vmem:[%s474 + $0x34] sm:$0xf]
        %v485 = vld [vmem:[%s474 + $0x3c] sm:$0xf]
        %v486 = vld [vmem:[%s474 + $0x40] sm:$0xf]
        %v487 = vld [vmem:[%s474 + $0x48] sm:$0xf]
        %v488 = vld [vmem:[%s474 + $0x4c] sm:$0xf]
        %v489 = vld [vmem:[%s474 + $0x54] sm:$0xf]
        %v490 = vld [vmem:[%s474 + $0x58] sm:$0xf]
        %v491 = vld [vmem:[%s474 + $0x8] sm:$0x1]
        %v492 = vld [vmem:[%s474 + $0x14] sm:$0x1]
        %v493 = vld [vmem:[%s474 + $0x20] sm:$0x1]
        %v494 = vld [vmem:[%s474 + $0x2c] sm:$0x1]
        %v495 = vld [vmem:[%s474 + $0x38] sm:$0x1]
        %v496 = vld [vmem:[%s474 + $0x44] sm:$0x1]
        %v497 = vld [vmem:[%s474 + $0x50] sm:$0x1]
        %v498 = vld [vmem:[%s474 + $0x5c] sm:$0x1]
        %v500 = vshrl.u32 %v475, 16
        %v502 = vrot.slane %v500, 4
        %v503 = vshll.u32 %v475, 16
        %v505 = vrot.slane %v503, 5
        %v506 = vor.u32 %v502, %v505
        %v507 = vrot.slane %v506, 4
        %v509 = vshll.u32 %v476, 16
        %v511 = vrot.slane %v509, 5
        %v512 = vsel %vm187, %v507, %v511
        %v513 = vshrl.u32 %v476, 16
        %v515 = vrot.slane %v513, 4
        %v516 = vor.u32 %v515, %v511
        %v517 = vrot.slane %v516, 4
        %v519 = vshll.u32 %v491, 16
        %v521 = vrot.slane %v519, 5
        %v522 = vsel %vm187, %v517, %v521
        %v524 = vshrl.u32 %v477, 16
        %v526 = vrot.slane %v524, 4
        %v527 = vshll.u32 %v477, 16
        %v529 = vrot.slane %v527, 5
        %v530 = vor.u32 %v526, %v529
        %v531 = vrot.slane %v530, 4
        %v533 = vshll.u32 %v478, 16
        %v535 = vrot.slane %v533, 5
        %v536 = vsel %vm187, %v531, %v535
        %v537 = vshrl.u32 %v478, 16
        %v539 = vrot.slane %v537, 4
        %v540 = vor.u32 %v539, %v535
        %v541 = vrot.slane %v540, 4
        %v543 = vshll.u32 %v492, 16
        %v545 = vrot.slane %v543, 5
        %v546 = vsel %vm187, %v541, %v545
        %v548 = vshrl.u32 %v479, 16
        %v550 = vrot.slane %v548, 4
        %v551 = vshll.u32 %v479, 16
        %v553 = vrot.slane %v551, 5
        %v554 = vor.u32 %v550, %v553
        %v555 = vrot.slane %v554, 4
        %v557 = vshll.u32 %v480, 16
        %v559 = vrot.slane %v557, 5
        %v560 = vsel %vm187, %v555, %v559
        %v561 = vshrl.u32 %v480, 16
        %v563 = vrot.slane %v561, 4
        %v564 = vor.u32 %v563, %v559
        %v565 = vrot.slane %v564, 4
        %v567 = vshll.u32 %v493, 16
        %v569 = vrot.slane %v567, 5
        %v570 = vsel %vm187, %v565, %v569
        %v572 = vshrl.u32 %v481, 16
        %v574 = vrot.slane %v572, 4
        %v575 = vshll.u32 %v481, 16
        %v577 = vrot.slane %v575, 5
        %v578 = vor.u32 %v574, %v577
        %v579 = vrot.slane %v578, 4
        %v581 = vshll.u32 %v482, 16
        %v583 = vrot.slane %v581, 5
        %v584 = vsel %vm187, %v579, %v583
        %v585 = vshrl.u32 %v482, 16
        %v587 = vrot.slane %v585, 4
        %v588 = vor.u32 %v587, %v583
        %v589 = vrot.slane %v588, 4
        %v591 = vshll.u32 %v494, 16
        %v593 = vrot.slane %v591, 5
        %v594 = vsel %vm187, %v589, %v593
        %v596 = vshrl.u32 %v483, 16
        %v598 = vrot.slane %v596, 4
        %v599 = vshll.u32 %v483, 16
        %v601 = vrot.slane %v599, 5
        %v602 = vor.u32 %v598, %v601
        %v603 = vrot.slane %v602, 4
        %v605 = vshll.u32 %v484, 16
        %v607 = vrot.slane %v605, 5
        %v608 = vsel %vm187, %v603, %v607
        %v609 = vshrl.u32 %v484, 16
        %v611 = vrot.slane %v609, 4
        %v612 = vor.u32 %v611, %v607
        %v613 = vrot.slane %v612, 4
        %v615 = vshll.u32 %v495, 16
        %v617 = vrot.slane %v615, 5
        %v618 = vsel %vm187, %v613, %v617
        %v620 = vshrl.u32 %v485, 16
        %v622 = vrot.slane %v620, 4
        %v623 = vshll.u32 %v485, 16
        %v625 = vrot.slane %v623, 5
        %v626 = vor.u32 %v622, %v625
        %v627 = vrot.slane %v626, 4
        %v629 = vshll.u32 %v486, 16
        %v631 = vrot.slane %v629, 5
        %v632 = vsel %vm187, %v627, %v631
        %v633 = vshrl.u32 %v486, 16
        %v635 = vrot.slane %v633, 4
        %v636 = vor.u32 %v635, %v631
        %v637 = vrot.slane %v636, 4
        %v639 = vshll.u32 %v496, 16
        %v641 = vrot.slane %v639, 5
        %v642 = vsel %vm187, %v637, %v641
        %v644 = vshrl.u32 %v487, 16
        %v646 = vrot.slane %v644, 4
        %v647 = vshll.u32 %v487, 16
        %v649 = vrot.slane %v647, 5
        %v650 = vor.u32 %v646, %v649
        %v651 = vrot.slane %v650, 4
        %v653 = vshll.u32 %v488, 16
        %v655 = vrot.slane %v653, 5
        %v656 = vsel %vm187, %v651, %v655
        %v657 = vshrl.u32 %v488, 16
        %v659 = vrot.slane %v657, 4
        %v660 = vor.u32 %v659, %v655
        %v661 = vrot.slane %v660, 4
        %v663 = vshll.u32 %v497, 16
        %v665 = vrot.slane %v663, 5
        %v666 = vsel %vm187, %v661, %v665
        %v668 = vshrl.u32 %v489, 16
        %v670 = vrot.slane %v668, 4
        %v671 = vshll.u32 %v489, 16
        %v673 = vrot.slane %v671, 5
        %v674 = vor.u32 %v670, %v673
        %v675 = vrot.slane %v674, 4
        %v677 = vshll.u32 %v490, 16
        %v679 = vrot.slane %v677, 5
        %v680 = vsel %vm187, %v675, %v679
        %v681 = vshrl.u32 %v490, 16
        %v683 = vrot.slane %v681, 4
        %v684 = vor.u32 %v683, %v679
        %v685 = vrot.slane %v684, 4
        %v687 = vshll.u32 %v498, 16
        %v689 = vrot.slane %v687, 5
        %v690 = vsel %vm187, %v685, %v689
        %v691 = vld [vmem:[%s474] sm:$0xe]
        %v692 = vld [vmem:[%s474 + $0xc] sm:$0xe]
        %v693 = vld [vmem:[%s474 + $0x18] sm:$0xe]
        %v694 = vld [vmem:[%s474 + $0x24] sm:$0xe]
        %v695 = vld [vmem:[%s474 + $0x30] sm:$0xe]
        %v696 = vld [vmem:[%s474 + $0x3c] sm:$0xe]
        %v697 = vld [vmem:[%s474 + $0x48] sm:$0xe]
        %v698 = vld [vmem:[%s474 + $0x54] sm:$0xe]
        %v723 = vrot.slane %v691, 5
        %v724 = vrot.slane %v723, 4
        %v725 = vrot.slane %v476, 5
        %v726 = vsel %vm414, %v724, %v725
        %v727 = vrot.slane %v725, 4
        %v728 = vrot.slane %v491, 5
        %v729 = vsel %vm414, %v727, %v728
        %v730 = vrot.slane %v692, 5
        %v731 = vrot.slane %v730, 4
        %v732 = vrot.slane %v478, 5
        %v733 = vsel %vm414, %v731, %v732
        %v734 = vrot.slane %v732, 4
        %v735 = vrot.slane %v492, 5
        %v736 = vsel %vm414, %v734, %v735
        %v737 = vrot.slane %v693, 5
        %v738 = vrot.slane %v737, 4
        %v739 = vrot.slane %v480, 5
        %v740 = vsel %vm414, %v738, %v739
        %v741 = vrot.slane %v739, 4
        %v742 = vrot.slane %v493, 5
        %v743 = vsel %vm414, %v741, %v742
        %v744 = vrot.slane %v694, 5
        %v745 = vrot.slane %v744, 4
        %v746 = vrot.slane %v482, 5
        %v747 = vsel %vm414, %v745, %v746
        %v748 = vrot.slane %v746, 4
        %v749 = vrot.slane %v494, 5
        %v750 = vsel %vm414, %v748, %v749
        %v751 = vrot.slane %v695, 5
        %v752 = vrot.slane %v751, 4
        %v753 = vrot.slane %v484, 5
        %v754 = vsel %vm414, %v752, %v753
        %v755 = vrot.slane %v753, 4
        %v756 = vrot.slane %v495, 5
        %v757 = vsel %vm414, %v755, %v756
        %v758 = vrot.slane %v696, 5
        %v759 = vrot.slane %v758, 4
        %v760 = vrot.slane %v486, 5
        %v761 = vsel %vm414, %v759, %v760
        %v762 = vrot.slane %v760, 4
        %v763 = vrot.slane %v496, 5
        %v764 = vsel %vm414, %v762, %v763
        %v765 = vrot.slane %v697, 5
        %v766 = vrot.slane %v765, 4
        %v767 = vrot.slane %v488, 5
        %v768 = vsel %vm414, %v766, %v767
        %v769 = vrot.slane %v767, 4
        %v770 = vrot.slane %v497, 5
        %v771 = vsel %vm414, %v769, %v770
        %v772 = vrot.slane %v698, 5
        %v773 = vrot.slane %v772, 4
        %v774 = vrot.slane %v490, 5
        %v775 = vsel %vm414, %v773, %v774
        %v776 = vrot.slane %v774, 4
        %v777 = vrot.slane %v498, 5
        %v778 = vsel %vm414, %v776, %v777
        %s779 = sadd.s32 %s157, 2
        %s780 = smul.u32 %s779, 3
        %s781 = smul.addr %s780, 4
        %s782 = scalar_lea.vmem %s155, %s781
        %v783 = vld [vmem:[%s782] sm:$0xf]
        %v784 = vld [vmem:[%s782 + $0x4] sm:$0xf]
        %v785 = vld [vmem:[%s782 + $0xc] sm:$0xf]
        %v786 = vld [vmem:[%s782 + $0x10] sm:$0xf]
        %v787 = vld [vmem:[%s782 + $0x18] sm:$0xf]
        %v788 = vld [vmem:[%s782 + $0x1c] sm:$0xf]
        %v789 = vld [vmem:[%s782 + $0x24] sm:$0xf]
        %v790 = vld [vmem:[%s782 + $0x28] sm:$0xf]
        %v791 = vld [vmem:[%s782 + $0x30] sm:$0xf]
        %v792 = vld [vmem:[%s782 + $0x34] sm:$0xf]
        %v793 = vld [vmem:[%s782 + $0x3c] sm:$0xf]
        %v794 = vld [vmem:[%s782 + $0x40] sm:$0xf]
        %v795 = vld [vmem:[%s782 + $0x48] sm:$0xf]
        %v796 = vld [vmem:[%s782 + $0x4c] sm:$0xf]
        %v797 = vld [vmem:[%s782 + $0x54] sm:$0xf]
        %v798 = vld [vmem:[%s782 + $0x58] sm:$0xf]
        %v799 = vld [vmem:[%s782 + $0x8] sm:$0x1]
        %v800 = vld [vmem:[%s782 + $0x14] sm:$0x1]
        %v801 = vld [vmem:[%s782 + $0x20] sm:$0x1]
        %v802 = vld [vmem:[%s782 + $0x2c] sm:$0x1]
        %v803 = vld [vmem:[%s782 + $0x38] sm:$0x1]
        %v804 = vld [vmem:[%s782 + $0x44] sm:$0x1]
        %v805 = vld [vmem:[%s782 + $0x50] sm:$0x1]
        %v806 = vld [vmem:[%s782 + $0x5c] sm:$0x1]
        %v808 = vshrl.u32 %v783, 16
        %v810 = vrot.slane %v808, 4
        %v811 = vshll.u32 %v783, 16
        %v813 = vrot.slane %v811, 5
        %v814 = vor.u32 %v810, %v813
        %v815 = vrot.slane %v814, 4
        %v817 = vshll.u32 %v784, 16
        %v819 = vrot.slane %v817, 5
        %v820 = vsel %vm187, %v815, %v819
        %v821 = vshrl.u32 %v784, 16
        %v823 = vrot.slane %v821, 4
        %v824 = vor.u32 %v823, %v819
        %v825 = vrot.slane %v824, 4
        %v827 = vshll.u32 %v799, 16
        %v829 = vrot.slane %v827, 5
        %v830 = vsel %vm187, %v825, %v829
        %v832 = vshrl.u32 %v785, 16
        %v834 = vrot.slane %v832, 4
        %v835 = vshll.u32 %v785, 16
        %v837 = vrot.slane %v835, 5
        %v838 = vor.u32 %v834, %v837
        %v839 = vrot.slane %v838, 4
        %v841 = vshll.u32 %v786, 16
        %v843 = vrot.slane %v841, 5
        %v844 = vsel %vm187, %v839, %v843
        %v845 = vshrl.u32 %v786, 16
        %v847 = vrot.slane %v845, 4
        %v848 = vor.u32 %v847, %v843
        %v849 = vrot.slane %v848, 4
        %v851 = vshll.u32 %v800, 16
        %v853 = vrot.slane %v851, 5
        %v854 = vsel %vm187, %v849, %v853
        %v856 = vshrl.u32 %v787, 16
        %v858 = vrot.slane %v856, 4
        %v859 = vshll.u32 %v787, 16
        %v861 = vrot.slane %v859, 5
        %v862 = vor.u32 %v858, %v861
        %v863 = vrot.slane %v862, 4
        %v865 = vshll.u32 %v788, 16
        %v867 = vrot.slane %v865, 5
        %v868 = vsel %vm187, %v863, %v867
        %v869 = vshrl.u32 %v788, 16
        %v871 = vrot.slane %v869, 4
        %v872 = vor.u32 %v871, %v867
        %v873 = vrot.slane %v872, 4
        %v875 = vshll.u32 %v801, 16
        %v877 = vrot.slane %v875, 5
        %v878 = vsel %vm187, %v873, %v877
        %v880 = vshrl.u32 %v789, 16
        %v882 = vrot.slane %v880, 4
        %v883 = vshll.u32 %v789, 16
        %v885 = vrot.slane %v883, 5
        %v886 = vor.u32 %v882, %v885
        %v887 = vrot.slane %v886, 4
        %v889 = vshll.u32 %v790, 16
        %v891 = vrot.slane %v889, 5
        %v892 = vsel %vm187, %v887, %v891
        %v893 = vshrl.u32 %v790, 16
        %v895 = vrot.slane %v893, 4
        %v896 = vor.u32 %v895, %v891
        %v897 = vrot.slane %v896, 4
        %v899 = vshll.u32 %v802, 16
        %v901 = vrot.slane %v899, 5
        %v902 = vsel %vm187, %v897, %v901
        %v904 = vshrl.u32 %v791, 16
        %v906 = vrot.slane %v904, 4
        %v907 = vshll.u32 %v791, 16
        %v909 = vrot.slane %v907, 5
        %v910 = vor.u32 %v906, %v909
        %v911 = vrot.slane %v910, 4
        %v913 = vshll.u32 %v792, 16
        %v915 = vrot.slane %v913, 5
        %v916 = vsel %vm187, %v911, %v915
        %v917 = vshrl.u32 %v792, 16
        %v919 = vrot.slane %v917, 4
        %v920 = vor.u32 %v919, %v915
        %v921 = vrot.slane %v920, 4
        %v923 = vshll.u32 %v803, 16
        %v925 = vrot.slane %v923, 5
        %v926 = vsel %vm187, %v921, %v925
        %v928 = vshrl.u32 %v793, 16
        %v930 = vrot.slane %v928, 4
        %v931 = vshll.u32 %v793, 16
        %v933 = vrot.slane %v931, 5
        %v934 = vor.u32 %v930, %v933
        %v935 = vrot.slane %v934, 4
        %v937 = vshll.u32 %v794, 16
        %v939 = vrot.slane %v937, 5
        %v940 = vsel %vm187, %v935, %v939
        %v941 = vshrl.u32 %v794, 16
        %v943 = vrot.slane %v941, 4
        %v944 = vor.u32 %v943, %v939
        %v945 = vrot.slane %v944, 4
        %v947 = vshll.u32 %v804, 16
        %v949 = vrot.slane %v947, 5
        %v950 = vsel %vm187, %v945, %v949
        %v952 = vshrl.u32 %v795, 16
        %v954 = vrot.slane %v952, 4
        %v955 = vshll.u32 %v795, 16
        %v957 = vrot.slane %v955, 5
        %v958 = vor.u32 %v954, %v957
        %v959 = vrot.slane %v958, 4
        %v961 = vshll.u32 %v796, 16
        %v963 = vrot.slane %v961, 5
        %v964 = vsel %vm187, %v959, %v963
        %v965 = vshrl.u32 %v796, 16
        %v967 = vrot.slane %v965, 4
        %v968 = vor.u32 %v967, %v963
        %v969 = vrot.slane %v968, 4
        %v971 = vshll.u32 %v805, 16
        %v973 = vrot.slane %v971, 5
        %v974 = vsel %vm187, %v969, %v973
        %v976 = vshrl.u32 %v797, 16
        %v978 = vrot.slane %v976, 4
        %v979 = vshll.u32 %v797, 16
        %v981 = vrot.slane %v979, 5
        %v982 = vor.u32 %v978, %v981
        %v983 = vrot.slane %v982, 4
        %v985 = vshll.u32 %v798, 16
        %v987 = vrot.slane %v985, 5
        %v988 = vsel %vm187, %v983, %v987
        %v989 = vshrl.u32 %v798, 16
        %v991 = vrot.slane %v989, 4
        %v992 = vor.u32 %v991, %v987
        %v993 = vrot.slane %v992, 4
        %v995 = vshll.u32 %v806, 16
        %v997 = vrot.slane %v995, 5
        %v998 = vsel %vm187, %v993, %v997
        %v999 = vld [vmem:[%s782] sm:$0xe]
        %v1000 = vld [vmem:[%s782 + $0xc] sm:$0xe]
        %v1001 = vld [vmem:[%s782 + $0x18] sm:$0xe]
        %v1002 = vld [vmem:[%s782 + $0x24] sm:$0xe]
        %v1003 = vld [vmem:[%s782 + $0x30] sm:$0xe]
        %v1004 = vld [vmem:[%s782 + $0x3c] sm:$0xe]
        %v1005 = vld [vmem:[%s782 + $0x48] sm:$0xe]
        %v1006 = vld [vmem:[%s782 + $0x54] sm:$0xe]
        %v1031 = vrot.slane %v999, 5
        %v1032 = vrot.slane %v1031, 4
        %v1033 = vrot.slane %v784, 5
        %v1034 = vsel %vm414, %v1032, %v1033
        %v1035 = vrot.slane %v1033, 4
        %v1036 = vrot.slane %v799, 5
        %v1037 = vsel %vm414, %v1035, %v1036
        %v1038 = vrot.slane %v1000, 5
        %v1039 = vrot.slane %v1038, 4
        %v1040 = vrot.slane %v786, 5
        %v1041 = vsel %vm414, %v1039, %v1040
        %v1042 = vrot.slane %v1040, 4
        %v1043 = vrot.slane %v800, 5
        %v1044 = vsel %vm414, %v1042, %v1043
        %v1045 = vrot.slane %v1001, 5
        %v1046 = vrot.slane %v1045, 4
        %v1047 = vrot.slane %v788, 5
        %v1048 = vsel %vm414, %v1046, %v1047
        %v1049 = vrot.slane %v1047, 4
        %v1050 = vrot.slane %v801, 5
        %v1051 = vsel %vm414, %v1049, %v1050
        %v1052 = vrot.slane %v1002, 5
        %v1053 = vrot.slane %v1052, 4
        %v1054 = vrot.slane %v790, 5
        %v1055 = vsel %vm414, %v1053, %v1054
        %v1056 = vrot.slane %v1054, 4
        %v1057 = vrot.slane %v802, 5
        %v1058 = vsel %vm414, %v1056, %v1057
        %v1059 = vrot.slane %v1003, 5
        %v1060 = vrot.slane %v1059, 4
        %v1061 = vrot.slane %v792, 5
        %v1062 = vsel %vm414, %v1060, %v1061
        %v1063 = vrot.slane %v1061, 4
        %v1064 = vrot.slane %v803, 5
        %v1065 = vsel %vm414, %v1063, %v1064
        %v1066 = vrot.slane %v1004, 5
        %v1067 = vrot.slane %v1066, 4
        %v1068 = vrot.slane %v794, 5
        %v1069 = vsel %vm414, %v1067, %v1068
        %v1070 = vrot.slane %v1068, 4
        %v1071 = vrot.slane %v804, 5
        %v1072 = vsel %vm414, %v1070, %v1071
        %v1073 = vrot.slane %v1005, 5
        %v1074 = vrot.slane %v1073, 4
        %v1075 = vrot.slane %v796, 5
        %v1076 = vsel %vm414, %v1074, %v1075
        %v1077 = vrot.slane %v1075, 4
        %v1078 = vrot.slane %v805, 5
        %v1079 = vsel %vm414, %v1077, %v1078
        %v1080 = vrot.slane %v1006, 5
        %v1081 = vrot.slane %v1080, 4
        %v1082 = vrot.slane %v798, 5
        %v1083 = vsel %vm414, %v1081, %v1082
        %v1084 = vrot.slane %v1082, 4
        %v1085 = vrot.slane %v806, 5
        %v1086 = vsel %vm414, %v1084, %v1085
        %v1095 = vunpack.c.l.b16 %v161
        %v1096 = vunpack.c.l.b16 %v162
        %v1097 = vunpack.c.l.b16 %v163
        %v1098 = vunpack.c.l.b16 %v164
        %v1099 = vunpack.c.l.b16 %v165
        %v1100 = vunpack.c.l.b16 %v166
        %v1101 = vunpack.c.l.b16 %v167
        %v1102 = vunpack.c.l.b16 %v168
        %v1103 = vunpack.c.l.b16 %v169
        %v1104 = vunpack.c.l.b16 %v170
        %v1105 = vunpack.c.l.b16 %v171
        %v1106 = vunpack.c.l.b16 %v172
        %v1107 = vunpack.c.l.b16 %v173
        %v1108 = vunpack.c.l.b16 %v174
        %v1109 = vunpack.c.l.b16 %v175
        %v1110 = vunpack.c.l.b16 %v176
        %v1111 = vpack.c.b16 %v1096, %v1095
        %v1112 = vpack.c.b16 %v1098, %v1097
        %v1113 = vpack.c.b16 %v1100, %v1099
        %v1114 = vpack.c.b16 %v1102, %v1101
        %v1115 = vpack.c.b16 %v1104, %v1103
        %v1116 = vpack.c.b16 %v1106, %v1105
        %v1117 = vpack.c.b16 %v1108, %v1107
        %v1118 = vpack.c.b16 %v1110, %v1109
        %v1119 = vunpack.c.l.b16 %v201
        %v1120 = vunpack.c.l.b16 %v211
        %v1121 = vunpack.c.l.b16 %v225
        %v1122 = vunpack.c.l.b16 %v235
        %v1123 = vunpack.c.l.b16 %v249
        %v1124 = vunpack.c.l.b16 %v259
        %v1125 = vunpack.c.l.b16 %v273
        %v1126 = vunpack.c.l.b16 %v283
        %v1127 = vunpack.c.l.b16 %v297
        %v1128 = vunpack.c.l.b16 %v307
        %v1129 = vunpack.c.l.b16 %v321
        %v1130 = vunpack.c.l.b16 %v331
        %v1131 = vunpack.c.l.b16 %v345
        %v1132 = vunpack.c.l.b16 %v355
        %v1133 = vunpack.c.l.b16 %v369
        %v1134 = vunpack.c.l.b16 %v379
        %v1135 = vpack.c.b16 %v1120, %v1119
        %v1136 = vpack.c.b16 %v1122, %v1121
        %v1137 = vpack.c.b16 %v1124, %v1123
        %v1138 = vpack.c.b16 %v1126, %v1125
        %v1139 = vpack.c.b16 %v1128, %v1127
        %v1140 = vpack.c.b16 %v1130, %v1129
        %v1141 = vpack.c.b16 %v1132, %v1131
        %v1142 = vpack.c.b16 %v1134, %v1133
        %1143 = vrot.lane.b32.xlu0 %v1135, 4
        %v1144 = vpop.permute.xlu0 %1143
        %1145 = vrot.lane.b32.xlu0 %v1136, 4
        %v1146 = vpop.permute.xlu0 %1145
        %1147 = vrot.lane.b32.xlu0 %v1137, 4
        %v1148 = vpop.permute.xlu0 %1147
        %1149 = vrot.lane.b32.xlu0 %v1138, 4
        %v1150 = vpop.permute.xlu0 %1149
        %1151 = vrot.lane.b32.xlu0 %v1139, 4
        %v1152 = vpop.permute.xlu0 %1151
        %1153 = vrot.lane.b32.xlu0 %v1140, 4
        %v1154 = vpop.permute.xlu0 %1153
        %1155 = vrot.lane.b32.xlu0 %v1141, 4
        %v1156 = vpop.permute.xlu0 %1155
        %1157 = vrot.lane.b32.xlu0 %v1142, 4
        %v1158 = vpop.permute.xlu0 %1157
        %v1159 = vunpack.c.l.b16 %v418
        %v1160 = vunpack.c.l.b16 %v421
        %v1161 = vunpack.c.l.b16 %v425
        %v1162 = vunpack.c.l.b16 %v428
        %v1163 = vunpack.c.l.b16 %v432
        %v1164 = vunpack.c.l.b16 %v435
        %v1165 = vunpack.c.l.b16 %v439
        %v1166 = vunpack.c.l.b16 %v442
        %v1167 = vunpack.c.l.b16 %v446
        %v1168 = vunpack.c.l.b16 %v449
        %v1169 = vunpack.c.l.b16 %v453
        %v1170 = vunpack.c.l.b16 %v456
        %v1171 = vunpack.c.l.b16 %v460
        %v1172 = vunpack.c.l.b16 %v463
        %v1173 = vunpack.c.l.b16 %v467
        %v1174 = vunpack.c.l.b16 %v470
        %v1175 = vpack.c.b16 %v1160, %v1159
        %v1176 = vpack.c.b16 %v1162, %v1161
        %v1177 = vpack.c.b16 %v1164, %v1163
        %v1178 = vpack.c.b16 %v1166, %v1165
        %v1179 = vpack.c.b16 %v1168, %v1167
        %v1180 = vpack.c.b16 %v1170, %v1169
        %v1181 = vpack.c.b16 %v1172, %v1171
        %v1182 = vpack.c.b16 %v1174, %v1173
        %1183 = vrot.lane.b32.xlu0 %v1175, 8
        %v1184 = vpop.permute.xlu0 %1183
        %1185 = vrot.lane.b32.xlu0 %v1176, 8
        %v1186 = vpop.permute.xlu0 %1185
        %1187 = vrot.lane.b32.xlu0 %v1177, 8
        %v1188 = vpop.permute.xlu0 %1187
        %1189 = vrot.lane.b32.xlu0 %v1178, 8
        %v1190 = vpop.permute.xlu0 %1189
        %1191 = vrot.lane.b32.xlu0 %v1179, 8
        %v1192 = vpop.permute.xlu0 %1191
        %1193 = vrot.lane.b32.xlu0 %v1180, 8
        %v1194 = vpop.permute.xlu0 %1193
        %1195 = vrot.lane.b32.xlu0 %v1181, 8
        %v1196 = vpop.permute.xlu0 %1195
        %1197 = vrot.lane.b32.xlu0 %v1182, 8
        %v1198 = vpop.permute.xlu0 %1197
        %v1207 = vunpack.c.l.b16 %v475
        %v1208 = vunpack.c.l.b16 %v476
        %v1209 = vunpack.c.l.b16 %v477
        %v1210 = vunpack.c.l.b16 %v478
        %v1211 = vunpack.c.l.b16 %v479
        %v1212 = vunpack.c.l.b16 %v480
        %v1213 = vunpack.c.l.b16 %v481
        %v1214 = vunpack.c.l.b16 %v482
        %v1215 = vunpack.c.l.b16 %v483
        %v1216 = vunpack.c.l.b16 %v484
        %v1217 = vunpack.c.l.b16 %v485
        %v1218 = vunpack.c.l.b16 %v486
        %v1219 = vunpack.c.l.b16 %v487
        %v1220 = vunpack.c.l.b16 %v488
        %v1221 = vunpack.c.l.b16 %v489
        %v1222 = vunpack.c.l.b16 %v490
        %v1223 = vpack.c.b16 %v1208, %v1207
        %v1224 = vpack.c.b16 %v1210, %v1209
        %v1225 = vpack.c.b16 %v1212, %v1211
        %v1226 = vpack.c.b16 %v1214, %v1213
        %v1227 = vpack.c.b16 %v1216, %v1215
        %v1228 = vpack.c.b16 %v1218, %v1217
        %v1229 = vpack.c.b16 %v1220, %v1219
        %v1230 = vpack.c.b16 %v1222, %v1221
        %1231 = vrot.lane.b32.xlu0 %v1223, 12
        %v1232 = vpop.permute.xlu0 %1231
        %1233 = vrot.lane.b32.xlu0 %v1224, 12
        %v1234 = vpop.permute.xlu0 %1233
        %1235 = vrot.lane.b32.xlu0 %v1225, 12
        %v1236 = vpop.permute.xlu0 %1235
        %1237 = vrot.lane.b32.xlu0 %v1226, 12
        %v1238 = vpop.permute.xlu0 %1237
        %1239 = vrot.lane.b32.xlu0 %v1227, 12
        %v1240 = vpop.permute.xlu0 %1239
        %1241 = vrot.lane.b32.xlu0 %v1228, 12
        %v1242 = vpop.permute.xlu0 %1241
        %1243 = vrot.lane.b32.xlu0 %v1229, 12
        %v1244 = vpop.permute.xlu0 %1243
        %1245 = vrot.lane.b32.xlu0 %v1230, 12
        %v1246 = vpop.permute.xlu0 %1245
        %v1247 = vunpack.c.l.b16 %v512
        %v1248 = vunpack.c.l.b16 %v522
        %v1249 = vunpack.c.l.b16 %v536
        %v1250 = vunpack.c.l.b16 %v546
        %v1251 = vunpack.c.l.b16 %v560
        %v1252 = vunpack.c.l.b16 %v570
        %v1253 = vunpack.c.l.b16 %v584
        %v1254 = vunpack.c.l.b16 %v594
        %v1255 = vunpack.c.l.b16 %v608
        %v1256 = vunpack.c.l.b16 %v618
        %v1257 = vunpack.c.l.b16 %v632
        %v1258 = vunpack.c.l.b16 %v642
        %v1259 = vunpack.c.l.b16 %v656
        %v1260 = vunpack.c.l.b16 %v666
        %v1261 = vunpack.c.l.b16 %v680
        %v1262 = vunpack.c.l.b16 %v690
        %v1263 = vpack.c.b16 %v1248, %v1247
        %v1264 = vpack.c.b16 %v1250, %v1249
        %v1265 = vpack.c.b16 %v1252, %v1251
        %v1266 = vpack.c.b16 %v1254, %v1253
        %v1267 = vpack.c.b16 %v1256, %v1255
        %v1268 = vpack.c.b16 %v1258, %v1257
        %v1269 = vpack.c.b16 %v1260, %v1259
        %v1270 = vpack.c.b16 %v1262, %v1261
        %1271 = vrot.lane.b32.xlu0 %v1263, 16
        %v1272 = vpop.permute.xlu0 %1271
        %1273 = vrot.lane.b32.xlu0 %v1264, 16
        %v1274 = vpop.permute.xlu0 %1273
        %1275 = vrot.lane.b32.xlu0 %v1265, 16
        %v1276 = vpop.permute.xlu0 %1275
        %1277 = vrot.lane.b32.xlu0 %v1266, 16
        %v1278 = vpop.permute.xlu0 %1277
        %1279 = vrot.lane.b32.xlu0 %v1267, 16
        %v1280 = vpop.permute.xlu0 %1279
        %1281 = vrot.lane.b32.xlu0 %v1268, 16
        %v1282 = vpop.permute.xlu0 %1281
        %1283 = vrot.lane.b32.xlu0 %v1269, 16
        %v1284 = vpop.permute.xlu0 %1283
        %1285 = vrot.lane.b32.xlu0 %v1270, 16
        %v1286 = vpop.permute.xlu0 %1285
        %v1287 = vunpack.c.l.b16 %v726
        %v1288 = vunpack.c.l.b16 %v729
        %v1289 = vunpack.c.l.b16 %v733
        %v1290 = vunpack.c.l.b16 %v736
        %v1291 = vunpack.c.l.b16 %v740
        %v1292 = vunpack.c.l.b16 %v743
        %v1293 = vunpack.c.l.b16 %v747
        %v1294 = vunpack.c.l.b16 %v750
        %v1295 = vunpack.c.l.b16 %v754
        %v1296 = vunpack.c.l.b16 %v757
        %v1297 = vunpack.c.l.b16 %v761
        %v1298 = vunpack.c.l.b16 %v764
        %v1299 = vunpack.c.l.b16 %v768
        %v1300 = vunpack.c.l.b16 %v771
        %v1301 = vunpack.c.l.b16 %v775
        %v1302 = vunpack.c.l.b16 %v778
        %v1303 = vpack.c.b16 %v1288, %v1287
        %v1304 = vpack.c.b16 %v1290, %v1289
        %v1305 = vpack.c.b16 %v1292, %v1291
        %v1306 = vpack.c.b16 %v1294, %v1293
        %v1307 = vpack.c.b16 %v1296, %v1295
        %v1308 = vpack.c.b16 %v1298, %v1297
        %v1309 = vpack.c.b16 %v1300, %v1299
        %v1310 = vpack.c.b16 %v1302, %v1301
        %1311 = vrot.lane.b32.xlu0 %v1303, 20
        %v1312 = vpop.permute.xlu0 %1311
        %1313 = vrot.lane.b32.xlu0 %v1304, 20
        %v1314 = vpop.permute.xlu0 %1313
        %1315 = vrot.lane.b32.xlu0 %v1305, 20
        %v1316 = vpop.permute.xlu0 %1315
        %1317 = vrot.lane.b32.xlu0 %v1306, 20
        %v1318 = vpop.permute.xlu0 %1317
        %1319 = vrot.lane.b32.xlu0 %v1307, 20
        %v1320 = vpop.permute.xlu0 %1319
        %1321 = vrot.lane.b32.xlu0 %v1308, 20
        %v1322 = vpop.permute.xlu0 %1321
        %1323 = vrot.lane.b32.xlu0 %v1309, 20
        %v1324 = vpop.permute.xlu0 %1323
        %1325 = vrot.lane.b32.xlu0 %v1310, 20
        %v1326 = vpop.permute.xlu0 %1325
        %v1335 = vunpack.c.l.b16 %v783
        %v1336 = vunpack.c.l.b16 %v784
        %v1337 = vunpack.c.l.b16 %v785
        %v1338 = vunpack.c.l.b16 %v786
        %v1339 = vunpack.c.l.b16 %v787
        %v1340 = vunpack.c.l.b16 %v788
        %v1341 = vunpack.c.l.b16 %v789
        %v1342 = vunpack.c.l.b16 %v790
        %v1343 = vunpack.c.l.b16 %v791
        %v1344 = vunpack.c.l.b16 %v792
        %v1345 = vunpack.c.l.b16 %v793
        %v1346 = vunpack.c.l.b16 %v794
        %v1347 = vunpack.c.l.b16 %v795
        %v1348 = vunpack.c.l.b16 %v796
        %v1349 = vunpack.c.l.b16 %v797
        %v1350 = vunpack.c.l.b16 %v798
        %v1351 = vpack.c.b16 %v1336, %v1335
        %v1352 = vpack.c.b16 %v1338, %v1337
        %v1353 = vpack.c.b16 %v1340, %v1339
        %v1354 = vpack.c.b16 %v1342, %v1341
        %v1355 = vpack.c.b16 %v1344, %v1343
        %v1356 = vpack.c.b16 %v1346, %v1345
        %v1357 = vpack.c.b16 %v1348, %v1347
        %v1358 = vpack.c.b16 %v1350, %v1349
        %1359 = vrot.lane.b32.xlu0 %v1351, 24
        %v1360 = vpop.permute.xlu0 %1359
        %1361 = vrot.lane.b32.xlu0 %v1352, 24
        %v1362 = vpop.permute.xlu0 %1361
        %1363 = vrot.lane.b32.xlu0 %v1353, 24
        %v1364 = vpop.permute.xlu0 %1363
        %1365 = vrot.lane.b32.xlu0 %v1354, 24
        %v1366 = vpop.permute.xlu0 %1365
        %1367 = vrot.lane.b32.xlu0 %v1355, 24
        %v1368 = vpop.permute.xlu0 %1367
        %1369 = vrot.lane.b32.xlu0 %v1356, 24
        %v1370 = vpop.permute.xlu0 %1369
        %1371 = vrot.lane.b32.xlu0 %v1357, 24
        %v1372 = vpop.permute.xlu0 %1371
        %1373 = vrot.lane.b32.xlu0 %v1358, 24
        %v1374 = vpop.permute.xlu0 %1373
        %v1375 = vunpack.c.l.b16 %v820
        %v1376 = vunpack.c.l.b16 %v830
        %v1377 = vunpack.c.l.b16 %v844
        %v1378 = vunpack.c.l.b16 %v854
        %v1379 = vunpack.c.l.b16 %v868
        %v1380 = vunpack.c.l.b16 %v878
        %v1381 = vunpack.c.l.b16 %v892
        %v1382 = vunpack.c.l.b16 %v902
        %v1383 = vunpack.c.l.b16 %v916
        %v1384 = vunpack.c.l.b16 %v926
        %v1385 = vunpack.c.l.b16 %v940
        %v1386 = vunpack.c.l.b16 %v950
        %v1387 = vunpack.c.l.b16 %v964
        %v1388 = vunpack.c.l.b16 %v974
        %v1389 = vunpack.c.l.b16 %v988
        %v1390 = vunpack.c.l.b16 %v998
        %v1391 = vpack.c.b16 %v1376, %v1375
        %v1392 = vpack.c.b16 %v1378, %v1377
        %v1393 = vpack.c.b16 %v1380, %v1379
        %v1394 = vpack.c.b16 %v1382, %v1381
        %v1395 = vpack.c.b16 %v1384, %v1383
        %v1396 = vpack.c.b16 %v1386, %v1385
        %v1397 = vpack.c.b16 %v1388, %v1387
        %v1398 = vpack.c.b16 %v1390, %v1389
        %1399 = vrot.lane.b32.xlu0 %v1391, 28
        %v1400 = vpop.permute.xlu0 %1399
        %1401 = vrot.lane.b32.xlu0 %v1392, 28
        %v1402 = vpop.permute.xlu0 %1401
        %1403 = vrot.lane.b32.xlu0 %v1393, 28
        %v1404 = vpop.permute.xlu0 %1403
        %1405 = vrot.lane.b32.xlu0 %v1394, 28
        %v1406 = vpop.permute.xlu0 %1405
        %1407 = vrot.lane.b32.xlu0 %v1395, 28
        %v1408 = vpop.permute.xlu0 %1407
        %1409 = vrot.lane.b32.xlu0 %v1396, 28
        %v1410 = vpop.permute.xlu0 %1409
        %1411 = vrot.lane.b32.xlu0 %v1397, 28
        %v1412 = vpop.permute.xlu0 %1411
        %1413 = vrot.lane.b32.xlu0 %v1398, 28
        %v1414 = vpop.permute.xlu0 %1413
        %v1415 = vunpack.c.l.b16 %v1034
        %v1416 = vunpack.c.l.b16 %v1037
        %v1417 = vunpack.c.l.b16 %v1041
        %v1418 = vunpack.c.l.b16 %v1044
        %v1419 = vunpack.c.l.b16 %v1048
        %v1420 = vunpack.c.l.b16 %v1051
        %v1421 = vunpack.c.l.b16 %v1055
        %v1422 = vunpack.c.l.b16 %v1058
        %v1423 = vunpack.c.l.b16 %v1062
        %v1424 = vunpack.c.l.b16 %v1065
        %v1425 = vunpack.c.l.b16 %v1069
        %v1426 = vunpack.c.l.b16 %v1072
        %v1427 = vunpack.c.l.b16 %v1076
        %v1428 = vunpack.c.l.b16 %v1079
        %v1429 = vunpack.c.l.b16 %v1083
        %v1430 = vunpack.c.l.b16 %v1086
        %v1431 = vpack.c.b16 %v1416, %v1415
        %v1432 = vpack.c.b16 %v1418, %v1417
        %v1433 = vpack.c.b16 %v1420, %v1419
        %v1434 = vpack.c.b16 %v1422, %v1421
        %v1435 = vpack.c.b16 %v1424, %v1423
        %v1436 = vpack.c.b16 %v1426, %v1425
        %v1437 = vpack.c.b16 %v1428, %v1427
        %v1438 = vpack.c.b16 %v1430, %v1429
        %1439 = vrot.lane.b32.xlu0 %v1431, 32
        %v1440 = vpop.permute.xlu0 %1439
        %1441 = vrot.lane.b32.xlu0 %v1432, 32
        %v1442 = vpop.permute.xlu0 %1441
        %1443 = vrot.lane.b32.xlu0 %v1433, 32
        %v1444 = vpop.permute.xlu0 %1443
        %1445 = vrot.lane.b32.xlu0 %v1434, 32
        %v1446 = vpop.permute.xlu0 %1445
        %1447 = vrot.lane.b32.xlu0 %v1435, 32
        %v1448 = vpop.permute.xlu0 %1447
        %1449 = vrot.lane.b32.xlu0 %v1436, 32
        %v1450 = vpop.permute.xlu0 %1449
        %1451 = vrot.lane.b32.xlu0 %v1437, 32
        %v1452 = vpop.permute.xlu0 %1451
        %1453 = vrot.lane.b32.xlu0 %v1438, 32
        %v1454 = vpop.permute.xlu0 %1453
        %vm1455 = vcmask 31744
        %v1458 = vsel %vm1455, %v1111, %v1144
        %v1461 = vsel %vm1455, %v1112, %v1146
        %v1464 = vsel %vm1455, %v1113, %v1148
        %v1467 = vsel %vm1455, %v1114, %v1150
        %v1470 = vsel %vm1455, %v1115, %v1152
        %v1473 = vsel %vm1455, %v1116, %v1154
        %v1476 = vsel %vm1455, %v1117, %v1156
        %v1479 = vsel %vm1455, %v1118, %v1158
        %vm1480 = vcmask 64512
        %v1482 = vsel %vm1480, %v1458, %v1184
        %v1484 = vsel %vm1480, %v1461, %v1186
        %v1486 = vsel %vm1480, %v1464, %v1188
        %v1488 = vsel %vm1480, %v1467, %v1190
        %v1490 = vsel %vm1480, %v1470, %v1192
        %v1492 = vsel %vm1480, %v1473, %v1194
        %v1494 = vsel %vm1480, %v1476, %v1196
        %v1496 = vsel %vm1480, %v1479, %v1198
        %vm1497 = vcmask 97280
        %v1499 = vsel %vm1497, %v1482, %v1232
        %v1501 = vsel %vm1497, %v1484, %v1234
        %v1503 = vsel %vm1497, %v1486, %v1236
        %v1505 = vsel %vm1497, %v1488, %v1238
        %v1507 = vsel %vm1497, %v1490, %v1240
        %v1509 = vsel %vm1497, %v1492, %v1242
        %v1511 = vsel %vm1497, %v1494, %v1244
        %v1513 = vsel %vm1497, %v1496, %v1246
        %vm1514 = vcmask 130048
        %v1516 = vsel %vm1514, %v1499, %v1272
        %v1518 = vsel %vm1514, %v1501, %v1274
        %v1520 = vsel %vm1514, %v1503, %v1276
        %v1522 = vsel %vm1514, %v1505, %v1278
        %v1524 = vsel %vm1514, %v1507, %v1280
        %v1526 = vsel %vm1514, %v1509, %v1282
        %v1528 = vsel %vm1514, %v1511, %v1284
        %v1530 = vsel %vm1514, %v1513, %v1286
        %vm1531 = vcmask 162816
        %v1533 = vsel %vm1531, %v1516, %v1312
        %v1535 = vsel %vm1531, %v1518, %v1314
        %v1537 = vsel %vm1531, %v1520, %v1316
        %v1539 = vsel %vm1531, %v1522, %v1318
        %v1541 = vsel %vm1531, %v1524, %v1320
        %v1543 = vsel %vm1531, %v1526, %v1322
        %v1545 = vsel %vm1531, %v1528, %v1324
        %v1547 = vsel %vm1531, %v1530, %v1326
        %vm1548 = vcmask 195584
        %v1550 = vsel %vm1548, %v1533, %v1360
        %v1552 = vsel %vm1548, %v1535, %v1362
        %v1554 = vsel %vm1548, %v1537, %v1364
        %v1556 = vsel %vm1548, %v1539, %v1366
        %v1558 = vsel %vm1548, %v1541, %v1368
        %v1560 = vsel %vm1548, %v1543, %v1370
        %v1562 = vsel %vm1548, %v1545, %v1372
        %v1564 = vsel %vm1548, %v1547, %v1374
        %vm1565 = vcmask 228352
        %v1567 = vsel %vm1565, %v1550, %v1400
        %v1569 = vsel %vm1565, %v1552, %v1402
        %v1571 = vsel %vm1565, %v1554, %v1404
        %v1573 = vsel %vm1565, %v1556, %v1406
        %v1575 = vsel %vm1565, %v1558, %v1408
        %v1577 = vsel %vm1565, %v1560, %v1410
        %v1579 = vsel %vm1565, %v1562, %v1412
        %v1581 = vsel %vm1565, %v1564, %v1414
        %vm1582 = vcmask 261120
        %v1584 = vsel %vm1582, %v1567, %v1440
        %v1586 = vsel %vm1582, %v1569, %v1442
        %v1588 = vsel %vm1582, %v1571, %v1444
        %v1590 = vsel %vm1582, %v1573, %v1446
        %v1592 = vsel %vm1582, %v1575, %v1448
        %v1594 = vsel %vm1582, %v1577, %v1450
        %v1596 = vsel %vm1582, %v1579, %v1452
        %v1598 = vsel %vm1582, %v1581, %v1454
        %v1599 = vld [vmem:[%s1] sm:$0xf]
        %v1600 = vld [vmem:[%s1 + $0x4] sm:$0xf]
        %v1601 = vld [vmem:[%s1 + $0x8] sm:$0xf]
        %v1602 = vld [vmem:[%s1 + $0xc] sm:$0xf]
        %v1603 = vld [vmem:[%s1 + $0x10] sm:$0x3]
        %v1609 = vunpack.c.l.b16 %v1599
        %v1610 = vunpack.c.l.b16 %v1600
        %v1611 = vunpack.c.l.b16 %v1601
        %v1612 = vunpack.c.l.b16 %v1602
        %v1613 = vunpack.c.l.b16 %v1603
        %v1614 = vpack.c.b16 %v1610, %v1609
        %v1615 = vpack.c.b16 %v1612, %v1611
        %v1616 = vpack.c.b16 %v1613, %v1613
        %vm1619 = vcmask 293888
        %v1620 = vsel %vm1619, %v1584, 0
        %v1622 = vsel %vm1619, %v1586, 0
        %v1624 = vsel %vm1619, %v1588, 0
        %v1626 = vsel %vm1619, %v1590, 0
        %v1628 = vsel %vm1619, %v1592, 0
        %v1630 = vsel %vm1619, %v1594, 0
        %v1632 = vsel %vm1619, %v1596, 0
        %v1634 = vsel %vm1619, %v1598, 0
        %vm1636 = vcmask 1041408
        %v1638 = vsel %vm1636, %v1616, 0
        %1640 = vmatprep.subr.bf16.mxu0 0
        %1641 = vmatpush1.bf16.msra.mxu0 0
        %1642 = vmatprep.subr.bf16.mxu0 0
        %1643 = vmatpush1.bf16.msra.mxu0 0
        %1644 = vmatprep.subr.bf16.mxu0 0
        %1645 = vmatpush1.bf16.msra.mxu0 0
        %1646 = vmatprep.subr.bf16.mxu0 0
        %1647 = vmatpush1.bf16.msra.mxu0 0
        %1648 = vmatprep.subr.bf16.mxu0 0
        %1649 = vmatpush1.bf16.msra.mxu0 0
        %1650 = vmatprep.subr.bf16.mxu0 0
        %1651 = vmatpush1.bf16.msra.mxu0 %v1638
        %1652 = vmatprep.subr.bf16.mxu0 0
        %1653 = vmatpush1.bf16.msra.mxu0 %v1615
        %1654 = vmatprep.subr.bf16.mxu0 0
        %1655 = vmatpush1.bf16.msra.mxu0 %v1614
        %1656 = vmatprep.subr.bf16.mxu0 0
        %1657 = vmatpush2.bf16.msra.mxu0 0
        %1658 = vmatprep.subr.bf16.mxu0 0
        %1659 = vmatpush2.bf16.msra.mxu0 0
        %1660 = vmatprep.subr.bf16.mxu0 0
        %1661 = vmatpush2.bf16.msra.mxu0 0
        %1662 = vmatprep.subr.bf16.mxu0 0
        %1663 = vmatpush2.bf16.msra.mxu0 0
        %1664 = vmatprep.subr.bf16.mxu0 0
        %1665 = vmatpush2.bf16.msra.mxu0 0
        %1666 = vmatprep.subr.bf16.mxu0 0
        %1667 = vmatpush2.bf16.msra.mxu0 0
        %1668 = vmatprep.subr.bf16.mxu0 0
        %1669 = vmatpush2.bf16.msra.mxu0 0
        %1670 = vmatprep.subr.bf16.mxu0 0
        %1671 = vmatpush2.bf16.msra.mxu0 0
        %1672 = vmatprep.mubr.bf16.mxu0 0
        %1673 = vmatmul.mubr.bf16.gmra.mxu0 %v1620
        %v1674 = vpop.f32.mrf.mxu0
        %v1675 = vadd.f32 0.0, %v1674
        %v1676 = vpop.f32.mrf.mxu0
        %v1677 = vpop.f32.mrf.mxu0
        %v1678 = vadd.f32 0.0, %v1677
        %v1679 = vpop.f32.mrf.mxu0
        %1680 = vmatprep.mubr.bf16.mxu0 0
        %1681 = vmatmul.mubr.bf16.gmra.mxu0 %v1622
        %v1682 = vpop.f32.mrf.mxu0
        %v1683 = vadd.f32 0.0, %v1682
        %v1684 = vpop.f32.mrf.mxu0
        %v1685 = vpop.f32.mrf.mxu0
        %v1686 = vadd.f32 0.0, %v1685
        %v1687 = vpop.f32.mrf.mxu0
        %1688 = vmatprep.mubr.bf16.mxu0 0
        %1689 = vmatmul.mubr.bf16.gmra.mxu0 %v1624
        %v1690 = vpop.f32.mrf.mxu0
        %v1691 = vadd.f32 0.0, %v1690
        %v1692 = vpop.f32.mrf.mxu0
        %v1693 = vpop.f32.mrf.mxu0
        %v1694 = vadd.f32 0.0, %v1693
        %v1695 = vpop.f32.mrf.mxu0
        %1696 = vmatprep.mubr.bf16.mxu0 0
        %1697 = vmatmul.mubr.bf16.gmra.mxu0 %v1626
        %v1698 = vpop.f32.mrf.mxu0
        %v1699 = vadd.f32 0.0, %v1698
        %v1700 = vpop.f32.mrf.mxu0
        %v1701 = vpop.f32.mrf.mxu0
        %v1702 = vadd.f32 0.0, %v1701
        %v1703 = vpop.f32.mrf.mxu0
        %1704 = vmatprep.mubr.bf16.mxu0 0
        %1705 = vmatmul.mubr.bf16.gmra.mxu0 %v1628
        %v1706 = vpop.f32.mrf.mxu0
        %v1707 = vadd.f32 0.0, %v1706
        %v1708 = vpop.f32.mrf.mxu0
        %v1709 = vpop.f32.mrf.mxu0
        %v1710 = vadd.f32 0.0, %v1709
        %v1711 = vpop.f32.mrf.mxu0
        %1712 = vmatprep.mubr.bf16.mxu0 0
        %1713 = vmatmul.mubr.bf16.gmra.mxu0 %v1630
        %v1714 = vpop.f32.mrf.mxu0
        %v1715 = vadd.f32 0.0, %v1714
        %v1716 = vpop.f32.mrf.mxu0
        %v1717 = vpop.f32.mrf.mxu0
        %v1718 = vadd.f32 0.0, %v1717
        %v1719 = vpop.f32.mrf.mxu0
        %1720 = vmatprep.mubr.bf16.mxu0 0
        %1721 = vmatmul.mubr.bf16.gmra.mxu0 %v1632
        %v1722 = vpop.f32.mrf.mxu0
        %v1723 = vadd.f32 0.0, %v1722
        %v1724 = vpop.f32.mrf.mxu0
        %v1725 = vpop.f32.mrf.mxu0
        %v1726 = vadd.f32 0.0, %v1725
        %v1727 = vpop.f32.mrf.mxu0
        %1728 = vmatprep.mubr.bf16.mxu0 0
        %1729 = vmatmul.mubr.bf16.gmra.mxu0 %v1634
        %v1730 = vpop.f32.mrf.mxu0
        %v1731 = vadd.f32 0.0, %v1730
        %v1732 = vpop.f32.mrf.mxu0
        %v1733 = vpop.f32.mrf.mxu0
        %v1734 = vadd.f32 0.0, %v1733
        %v1735 = vpop.f32.mrf.mxu0
        %1736 = vdwg.mxu0
        %v1737 = vadd.f32 %v1675, %v1678
        %v1738 = vadd.f32 %v1737, %v1683
        %v1739 = vadd.f32 %v1738, %v1686
        %v1740 = vadd.f32 %v1739, %v1691
        %v1741 = vadd.f32 %v1740, %v1694
        %v1742 = vadd.f32 %v1741, %v1699
        %v1743 = vadd.f32 %v1742, %v1702
        %v1744 = vadd.f32 %v1743, %v1707
        %v1745 = vadd.f32 %v1744, %v1710
        %v1746 = vadd.f32 %v1745, %v1715
        %v1747 = vadd.f32 %v1746, %v1718
        %v1748 = vadd.f32 %v1747, %v1723
        %v1749 = vadd.f32 %v1748, %v1726
        %v1750 = vadd.f32 %v1749, %v1731
        %v1751 = vadd.f32 %v1750, %v1734
        %v1752 = vrot.slane %v1751, 4
        %v1753 = vadd.f32 %v1751, %v1752
        %v1754 = vrot.slane %v1753, 2
        %v1755 = vadd.f32 %v1753, %v1754
        %v1756 = vrot.slane %v1755, 1
        %v1757 = vadd.f32 %v1755, %v1756
        %v1758 = vmul.f32 %v1675, %v1675
        %v1759 = vmul.f32 %v1678, %v1678
        %v1760 = vmul.f32 %v1683, %v1683
        %v1761 = vmul.f32 %v1686, %v1686
        %v1762 = vmul.f32 %v1691, %v1691
        %v1763 = vmul.f32 %v1694, %v1694
        %v1764 = vmul.f32 %v1699, %v1699
        %v1765 = vmul.f32 %v1702, %v1702
        %v1766 = vmul.f32 %v1707, %v1707
        %v1767 = vmul.f32 %v1710, %v1710
        %v1768 = vmul.f32 %v1715, %v1715
        %v1769 = vmul.f32 %v1718, %v1718
        %v1770 = vmul.f32 %v1723, %v1723
        %v1771 = vmul.f32 %v1726, %v1726
        %v1772 = vmul.f32 %v1731, %v1731
        %v1773 = vmul.f32 %v1734, %v1734
        %v1774 = vadd.f32 %v1758, %v1759
        %v1775 = vadd.f32 %v1774, %v1760
        %v1776 = vadd.f32 %v1775, %v1761
        %v1777 = vadd.f32 %v1776, %v1762
        %v1778 = vadd.f32 %v1777, %v1763
        %v1779 = vadd.f32 %v1778, %v1764
        %v1780 = vadd.f32 %v1779, %v1765
        %v1781 = vadd.f32 %v1780, %v1766
        %v1782 = vadd.f32 %v1781, %v1767
        %v1783 = vadd.f32 %v1782, %v1768
        %v1784 = vadd.f32 %v1783, %v1769
        %v1785 = vadd.f32 %v1784, %v1770
        %v1786 = vadd.f32 %v1785, %v1771
        %v1787 = vadd.f32 %v1786, %v1772
        %v1788 = vadd.f32 %v1787, %v1773
        %v1789 = vrot.slane %v1788, 4
        %v1790 = vadd.f32 %v1788, %v1789
        %v1791 = vrot.slane %v1790, 2
        %v1792 = vadd.f32 %v1790, %v1791
        %v1793 = vrot.slane %v1792, 1
        %v1794 = vadd.f32 %v1792, %v1793
        %vm1795 = vcmask 1040384
        %v1796 = vsel %vm1795, %v1757, %v1794
        %1797 = vst [vmem:[%s150] sm:$0x3] %v1796
        %s1798 = sand.u32 %s85, 1
        %s1799 = scalar_lea.sflag [#allocation3], %s1798
        %s1800 = sand.u32 %s85, 1
        %s1801 = smul.addr %s1800, 2
        %s1802 = scalar_lea.vmem [#allocation2], %s1801
        // Predicated region
        $region29: #{tpu_custom_call.1} parent=27 // pred_check
          %p1803 = pneg %p95
        $region30: #{tpu_custom_call.1} parent=27 // pred_check_branch
          %1805 = sbr.rel (%p1803) target = $region32
        $region31: #{tpu_custom_call.1} parent=27 // pred_region
          %s1807 = ssub.s32 32, 32
          %1808 = vsyncadd %s1799, %s1807
          %s1809 = smul.addr %s20, 2
          %s1810 = sadd.s32 %s21, %s1809
          %s1811 = smul.addr %s1810, 32
          %s1812 = scalar_lea.hbm %s2, %s1811
          %s1814 = sshll.u32 %s1802, 4
          %s1815 = int_to_ptr.vmem [resolvable:$true] %s1814
          %1817 = dma.vmem_to_hbm [thread:$0]  %s1815, 32, %s1812, %s1799
        $region32: #{tpu_custom_call.1} parent=27 // pred_fallthru
          _
      $region28: #{tpu_custom_call.1} parent=5 // pred_fallthru
        _
      %p1818 = scmp.le.s32.totalorder 2, %s11
      // Predicated region
      $region33: #{tpu_custom_call.1} parent=5 // pred_check
        %p1819 = pneg %p1818
      $region34: #{tpu_custom_call.1} parent=5 // pred_check_branch
        %1821 = sbr.rel (%p1819) target = $region36
      $region35: #{tpu_custom_call.1} parent=5 // pred_region
        %s1822 = ssub.s32 %s11, 2
        // Predicated region
        $region37: #{tpu_custom_call.1} parent=35 // pred_check
          %p1823 = pneg %p101
        $region38: #{tpu_custom_call.1} parent=35 // pred_check_branch
          %1825 = sbr.rel (%p1823) target = $region40
        $region39: #{tpu_custom_call.1} parent=35 // pred_region
          %s1826 = sand.u32 %s86, 1
          %s1827 = scalar_lea.sflag [#allocation3], %s1826
          %s1828 = sand.u32 %s86, 1
          %s1829 = smul.addr %s1828, 2
          %s1830 = scalar_lea.vmem [#allocation2], %s1829
          %1831 = dma.done %s1827, 32
        $region40: #{tpu_custom_call.1} parent=35 // pred_fallthru
          _
      $region36: #{tpu_custom_call.1} parent=5 // pred_fallthru
        _
    $region6: #{tpu_custom_call.1} parent=1 // loop_footer
      %s15 = sadd.s32 1, %s11
    $region7: #{tpu_custom_call.1} parent=1 // loop_footer_branch
      %10 = sbr.rel target = $region3
    $region8: #{tpu_custom_call.1} parent=1 // loop_exit
      _
    %1832 = vsyncpa [#allocation3], 1
    %s1833 = scalar_lea.sflag [#allocation3], 1
    %1834 = vsyncpa %s1833, 1

</llo_original>
